<compile_context>
chip_gen: v6e
topology: v6e:2x2x1
jax: 0.10.0
libtpu: 0.0.40
codegen_flags: <defaults>
</compile_context>

<pallas_src>
import functools

import jax
import jax.numpy as jnp
from jax.experimental import pallas as pl
from jax.experimental.pallas import tpu as pltpu


def _cbam_kernel(x_ref, w1t_ref, w2_ref, wt_ref, rmask_ref, cmask_ref, cb_ref,
                 o_ref, *, H, W):
    HW = H * W

    xw = x_ref[0]                                               # (C, HW) native dtype

    # ---------------- Channel attention ----------------
    avg = jnp.mean(xw, axis=1, keepdims=True, dtype=jnp.float32)     # (C, 1) f32
    mx = jnp.max(xw, axis=1, keepdims=True).astype(jnp.float32)      # (C, 1) f32

    w1t = w1t_ref[...]                                          # (C, Ch) == W1^T
    w2 = w2_ref[...]                                            # (C, Ch) == W2

    def shared_mlp(v):                                          # (C, 1) -> (C, 1)
        h = jnp.sum(w1t * v, axis=0, keepdims=True)             # (1, Ch)
        h = jnp.maximum(h, 0.0)                                  # ReLU
        return jnp.sum(w2 * h, axis=1, keepdims=True)            # (C, 1)

    ca = jax.nn.sigmoid(shared_mlp(avg) + shared_mlp(mx))        # (C, 1) f32
    scaled = xw * ca.astype(xw.dtype)                            # (C, HW)  y = ca*x

    # ---------------- Spatial attention: 7x7 conv via XLU rolls ----------------
    mean_map = jnp.mean(scaled, axis=0, keepdims=True, dtype=jnp.float32)  # (1, HW)
    max_map = jnp.max(scaled, axis=0, keepdims=True).astype(jnp.float32)   # (1, HW)
    maps = jnp.concatenate([mean_map, max_map], axis=0)          # (2, HW) f32

    # Column-shifted, column-masked copies (dw = -3..3).  cmask depends only on
    # the output column, which is invariant under later shifts by dh*W.
    pre = []
    for dwi in range(7):
        dw = dwi - 3
        m = maps if dw == 0 else pltpu.roll(maps, shift=(-dw) % HW, axis=1)
        if dw != 0:
            m = m * cmask_ref[dwi:dwi + 1, :]
        pre.append(m)

    # dh-grouped accumulation: 7 independent inner chains of 7 taps each.
    acc = jnp.zeros((2, HW), jnp.float32)
    for dhi in range(7):
        dh = dhi - 3
        srow = (-(dh * W)) % HW
        inner = jnp.zeros((2, HW), jnp.float32)
        for dwi in range(7):
            t = dhi * 7 + dwi
            tap = pre[dwi] if dh == 0 else pltpu.roll(pre[dwi], shift=srow, axis=1)
            inner = inner + wt_ref[t] * tap                       # (2,1) * (2,HW)
        if dh != 0:
            inner = inner * rmask_ref[dhi:dhi + 1, :]
        acc = acc + inner

    sa = jax.nn.sigmoid(acc[0:1, :] + acc[1:2, :] + cb_ref[0])    # (1, HW)

    # ---------------- Final output ----------------
    o_ref[0] = (scaled * sa.astype(scaled.dtype)).astype(o_ref.dtype)


def _spatial_masks(H, W):
    """Row / column validity masks for a 7x7 conv with zero padding 3.

    rmask[dh+3, p] = 1 iff 0 <= row(p)+dh < H ; cmask[dw+3, p] similarly for cols.
    """
    HW = H * W
    row = jnp.arange(HW, dtype=jnp.int32) // W
    col = jnp.arange(HW, dtype=jnp.int32) % W
    rrows, crows = [], []
    for d in range(-3, 4):
        rrows.append(((row + d >= 0) & (row + d < H)).astype(jnp.float32))
        crows.append(((col + d >= 0) & (col + d < W)).astype(jnp.float32))
    return jnp.stack(rrows), jnp.stack(crows)                    # (7, HW) each


@jax.jit
def cbam_pallas(x_nchw, w1, w2, conv_w, conv_b):
    """CBAM forward.

    x_nchw : (N, C, H, W)
    w1     : (C//ratio, C, 1, 1)   Conv2d(C, C//ratio, 1, bias=False) weight
    w2     : (C, C//ratio, 1, 1)   Conv2d(C//ratio, C, 1, bias=False) weight
    conv_w : (1, 2, 7, 7)          Conv2d(2, 1, 7, padding=3) weight
    conv_b : (1,)                  Conv2d(2, 1, 7, padding=3) bias
    returns: (N, C, H, W)
    """
    N, C, H, W = x_nchw.shape
    Ch = w1.shape[0]
    HW = H * W

    # TODO(synk): if HW is not a multiple of 128, pad HW here (and mask the
    # pooled means) so the big loads/stores stay lane-dense.
    x = x_nchw.reshape(N, C, HW)                                 # metadata-only

    w1t = jnp.transpose(w1.reshape(Ch, C)).astype(jnp.float32)   # (C, Ch)
    w2m = w2.reshape(C, Ch).astype(jnp.float32)                  # (C, Ch)
    # Per-tap conv weights, t = (dh+3)*7 + (dw+3); channel 0 = mean, 1 = max.
    wt_tab = jnp.transpose(conv_w[0].astype(jnp.float32),
                           (1, 2, 0)).reshape(49, 2, 1)          # (49, 2, 1)
    rmask, cmask = _spatial_masks(H, W)                          # (7, HW) each
    cb = conv_b.astype(jnp.float32).reshape(1)                   # (1,) SMEM scalar

    kernel = functools.partial(_cbam_kernel, H=H, W=W)

    # Scoped VMEM: double-buffered in/out blocks + f32 intermediates + tables,
    # with generous headroom; capped below physical VMEM on all chips.
    itemsize = jnp.dtype(x_nchw.dtype).itemsize
    est = (4 * C * HW * itemsize                                 # 2x in + 2x out
           + 3 * C * HW * 4                                      # f32 intermediates
           + (14 * HW + 49 * 1024 + 2 * C * Ch + 24 * HW) * 4)   # masks/weights/maps
    vmem_limit = int(min(max(2 * est, 32 << 20), 96 << 20))

    out = pl.pallas_call(
        kernel,
        out_shape=jax.ShapeDtypeStruct((N, C, HW), x_nchw.dtype),
        grid_spec=pltpu.PrefetchScalarGridSpec(
            num_scalar_prefetch=0,
            grid=(N,),
            in_specs=[
                pl.BlockSpec((1, C, HW), lambda n: (n, 0, 0)),       # x (streamed)
                pl.BlockSpec((C, Ch), lambda n: (0, 0)),             # W1^T (resident)
                pl.BlockSpec((C, Ch), lambda n: (0, 0)),             # W2   (resident)
                pl.BlockSpec((49, 2, 1), lambda n: (0, 0, 0)),       # per-tap weights
                pl.BlockSpec((7, HW), lambda n: (0, 0)),             # row masks
                pl.BlockSpec((7, HW), lambda n: (0, 0)),             # col masks
                pl.BlockSpec(memory_space=pltpu.MemorySpace.SMEM),   # conv bias
            ],
            out_specs=pl.BlockSpec((1, C, HW), lambda n: (n, 0, 0)),
        ),
        compiler_params=pltpu.CompilerParams(
            dimension_semantics=("parallel",),
            vmem_limit_bytes=vmem_limit),
    )(x, w1t, w2m, wt_tab, rmask, cmask, cb)

    return out.reshape(N, C, H, W)


def _reference(x, w1, w2, conv_w, conv_b):
    """Pure-JAX CBAM reference (mirrors the PyTorch module)."""
    N, C, H, W = x.shape
    Ch = w1.shape[0]
    w1m = w1.reshape(Ch, C)
    w2m = w2.reshape(C, Ch)

    def mlp(v):                                                  # (N, C) -> (N, C)
        h = jnp.maximum(v @ w1m.T, 0.0)
        return h @ w2m.T

    avg = jnp.mean(x, axis=(2, 3))
    mx = jnp.max(x, axis=(2, 3))
    ca = jax.nn.sigmoid(mlp(avg) + mlp(mx))                      # (N, C)
    y = x * ca[:, :, None, None]

    mean_map = jnp.mean(y, axis=1, keepdims=True)
    max_map = jnp.max(y, axis=1, keepdims=True)
    cat = jnp.concatenate([mean_map, max_map], axis=1)           # (N, 2, H, W)
    conv = jax.lax.conv_general_dilated(
        cat, conv_w, window_strides=(1, 1), padding=((3, 3), (3, 3)),
        dimension_numbers=("NCHW", "OIHW", "NCHW"))
    sa = jax.nn.sigmoid(conv + conv_b.reshape(1, 1, 1, 1))
    return y * sa


if __name__ == "__main__":
    key = jax.random.PRNGKey(0)
    k1, k2, k3, k4, k5 = jax.random.split(key, 5)

    N, C, H, W = 2, 32, 16, 16
    ratio = 16
    Ch = C // ratio                                              # 2

    x = jax.random.normal(k1, (N, C, H, W), dtype=jnp.float32)

    # Conv2d-style uniform init, shapes match the nn modules in CBAM(32)
    b1 = 1.0 / (C ** 0.5)
    w1 = jax.random.uniform(k2, (Ch, C, 1, 1), jnp.float32, -b1, b1)
    b2 = 1.0 / (Ch ** 0.5)
    w2 = jax.random.uniform(k3, (C, Ch, 1, 1), jnp.float32, -b2, b2)
    b3 = 1.0 / ((2 * 7 * 7) ** 0.5)
    conv_w = jax.random.uniform(k4, (1, 2, 7, 7), jnp.float32, -b3, b3)
    conv_b = jax.random.uniform(k5, (1,), jnp.float32, -b3, b3)

    out = cbam_pallas(x, w1, w2, conv_w, conv_b)
    out = jax.block_until_ready(out)

    ref = _reference(x, w1, w2, conv_w, conv_b)
    assert out.shape == (N, C, H, W), out.shape
    max_err = float(jnp.max(jnp.abs(out - ref)))
    assert jnp.allclose(out, ref, atol=1e-4, rtol=1e-4), f"mismatch {max_err}"

    print("KERNEL_OK")
</pallas_src>

<mosaic_0001>
module attributes {stable_mosaic.version = 11 : i64} {
  func.func @_cbam_kernel(%arg0: i32, %arg1: memref<1x32x256xf32, #tpu.memory_space<vmem>>, %arg2: memref<32x2xf32, #tpu.memory_space<vmem>>, %arg3: memref<32x2xf32, #tpu.memory_space<vmem>>, %arg4: memref<49x2x1xf32, #tpu.memory_space<vmem>>, %arg5: memref<7x256xf32, #tpu.memory_space<vmem>>, %arg6: memref<7x256xf32, #tpu.memory_space<vmem>>, %arg7: memref<1xf32, #tpu.memory_space<smem>>, %arg8: memref<1x32x256xf32, #tpu.memory_space<vmem>>) attributes {dimension_semantics = [#tpu.dimension_semantics<parallel>], iteration_bounds = array<i64: 2>, scalar_prefetch = 0 : i64, scratch_operands = 0 : i64, tpu.core_type = #tpu.core_type<tc>, window_params = [{transform_indices = @transform_0, window_bounds = array<i64: 1, 32, 256>}, {pipeline_mode = #tpu.pipeline_mode<synchronous>, transform_indices = @transform_1, window_bounds = array<i64: 32, 2>}, {pipeline_mode = #tpu.pipeline_mode<synchronous>, transform_indices = @transform_2, window_bounds = array<i64: 32, 2>}, {pipeline_mode = #tpu.pipeline_mode<synchronous>, transform_indices = @transform_3, window_bounds = array<i64: 49, 2, 1>}, {pipeline_mode = #tpu.pipeline_mode<synchronous>, transform_indices = @transform_4, window_bounds = array<i64: 7, 256>}, {pipeline_mode = #tpu.pipeline_mode<synchronous>, transform_indices = @transform_5, window_bounds = array<i64: 7, 256>}, {transform_indices = @transform_6, window_bounds = array<i64: 1>}, {transform_indices = @transform_7, window_bounds = array<i64: 1, 32, 256>}]} {
    %c0 = arith.constant 0 : index
    %c0_0 = arith.constant 0 : index
    %c0_1 = arith.constant 0 : index
    %0 = vector.load %arg1[%c0, %c0_0, %c0_1] : memref<1x32x256xf32, #tpu.memory_space<vmem>>, vector<1x32x256xf32>
    %1 = vector.shape_cast %0 : vector<1x32x256xf32> to vector<32x256xf32>
    %cst = arith.constant dense<0.000000e+00> : vector<32xf32>
    %2 = vector.multi_reduction <add>, %1, %cst [1] : vector<32x256xf32> to vector<32xf32>
    %3 = vector.shape_cast %2 : vector<32xf32> to vector<32x1xf32>
    %cst_2 = arith.constant 2.560000e+02 : f32
    %4 = vector.broadcast %cst_2 : f32 to vector<32x1xf32>
    %5 = arith.divf %3, %4 : vector<32x1xf32>
    %cst_3 = arith.constant dense<0xFF800000> : vector<32xf32>
    %6 = vector.multi_reduction <maximumf>, %1, %cst_3 [1] : vector<32x256xf32> to vector<32xf32>
    %7 = vector.shape_cast %6 : vector<32xf32> to vector<32x1xf32>
    %c0_4 = arith.constant 0 : index
    %c0_5 = arith.constant 0 : index
    %8 = vector.load %arg2[%c0_4, %c0_5] : memref<32x2xf32, #tpu.memory_space<vmem>>, vector<32x2xf32>
    %c0_6 = arith.constant 0 : index
    %c0_7 = arith.constant 0 : index
    %9 = vector.load %arg3[%c0_6, %c0_7] : memref<32x2xf32, #tpu.memory_space<vmem>>, vector<32x2xf32>
    %10 = vector.broadcast %5 : vector<32x1xf32> to vector<32x2xf32>
    %11 = arith.mulf %8, %10 : vector<32x2xf32>
    %cst_8 = arith.constant dense<0.000000e+00> : vector<2xf32>
    %12 = vector.multi_reduction <add>, %11, %cst_8 [0] : vector<32x2xf32> to vector<2xf32>
    %13 = vector.shape_cast %12 : vector<2xf32> to vector<1x2xf32>
    %cst_9 = arith.constant 0.000000e+00 : f32
    %14 = vector.broadcast %cst_9 : f32 to vector<1x2xf32>
    %15 = arith.maximumf %13, %14 : vector<1x2xf32>
    %16 = vector.broadcast %15 : vector<1x2xf32> to vector<32x2xf32>
    %17 = arith.mulf %9, %16 : vector<32x2xf32>
    %cst_10 = arith.constant dense<0.000000e+00> : vector<32xf32>
    %18 = vector.multi_reduction <add>, %17, %cst_10 [1] : vector<32x2xf32> to vector<32xf32>
    %19 = vector.shape_cast %18 : vector<32xf32> to vector<32x1xf32>
    %20 = vector.broadcast %7 : vector<32x1xf32> to vector<32x2xf32>
    %21 = arith.mulf %8, %20 : vector<32x2xf32>
    %cst_11 = arith.constant dense<0.000000e+00> : vector<2xf32>
    %22 = vector.multi_reduction <add>, %21, %cst_11 [0] : vector<32x2xf32> to vector<2xf32>
    %23 = vector.shape_cast %22 : vector<2xf32> to vector<1x2xf32>
    %cst_12 = arith.constant 0.000000e+00 : f32
    %24 = vector.broadcast %cst_12 : f32 to vector<1x2xf32>
    %25 = arith.maximumf %23, %24 : vector<1x2xf32>
    %26 = vector.broadcast %25 : vector<1x2xf32> to vector<32x2xf32>
    %27 = arith.mulf %9, %26 : vector<32x2xf32>
    %cst_13 = arith.constant dense<0.000000e+00> : vector<32xf32>
    %28 = vector.multi_reduction <add>, %27, %cst_13 [1] : vector<32x2xf32> to vector<32xf32>
    %29 = vector.shape_cast %28 : vector<32xf32> to vector<32x1xf32>
    %30 = arith.addf %19, %29 : vector<32x1xf32>
    %31 = arith.negf %30 : vector<32x1xf32>
    %32 = math.exp %31 : vector<32x1xf32>
    %cst_14 = arith.constant 1.000000e+00 : f32
    %33 = vector.broadcast %cst_14 : f32 to vector<32x1xf32>
    %34 = arith.addf %33, %32 : vector<32x1xf32>
    %35 = arith.divf %33, %34 : vector<32x1xf32>
    %36 = vector.broadcast %35 : vector<32x1xf32> to vector<32x256xf32>
    %37 = arith.mulf %1, %36 : vector<32x256xf32>
    %cst_15 = arith.constant dense<0.000000e+00> : vector<256xf32>
    %38 = vector.multi_reduction <add>, %37, %cst_15 [0] : vector<32x256xf32> to vector<256xf32>
    %39 = vector.shape_cast %38 : vector<256xf32> to vector<1x256xf32>
    %cst_16 = arith.constant 3.200000e+01 : f32
    %40 = vector.broadcast %cst_16 : f32 to vector<1x256xf32>
    %41 = arith.divf %39, %40 : vector<1x256xf32>
    %cst_17 = arith.constant dense<0xFF800000> : vector<256xf32>
    %42 = vector.multi_reduction <maximumf>, %37, %cst_17 [0] : vector<32x256xf32> to vector<256xf32>
    %43 = vector.shape_cast %42 : vector<256xf32> to vector<1x256xf32>
    %44 = tpu.concatenate %41, %43 in 0 : vector<1x256xf32>, vector<1x256xf32> -> vector<2x256xf32>
    %c3_i32 = arith.constant 3 : i32
    %45 = tpu.dynamic_rotate %44 by %c3_i32 dim 1 : vector<2x256xf32>, i32 -> vector<2x256xf32>
    %c0_18 = arith.constant 0 : index
    %c0_19 = arith.constant 0 : index
    %46 = vector.load %arg6[%c0_18, %c0_19] : memref<7x256xf32, #tpu.memory_space<vmem>>, vector<1x256xf32>
    %47 = vector.broadcast %46 : vector<1x256xf32> to vector<2x256xf32>
    %48 = arith.mulf %45, %47 : vector<2x256xf32>
    %c2_i32 = arith.constant 2 : i32
    %49 = tpu.dynamic_rotate %44 by %c2_i32 dim 1 : vector<2x256xf32>, i32 -> vector<2x256xf32>
    %c1 = arith.constant 1 : index
    %c0_20 = arith.constant 0 : index
    %50 = vector.load %arg6[%c1, %c0_20] : memref<7x256xf32, #tpu.memory_space<vmem>>, vector<1x256xf32>
    %51 = vector.broadcast %50 : vector<1x256xf32> to vector<2x256xf32>
    %52 = arith.mulf %49, %51 : vector<2x256xf32>
    %c1_i32 = arith.constant 1 : i32
    %53 = tpu.dynamic_rotate %44 by %c1_i32 dim 1 : vector<2x256xf32>, i32 -> vector<2x256xf32>
    %c2 = arith.constant 2 : index
    %c0_21 = arith.constant 0 : index
    %54 = vector.load %arg6[%c2, %c0_21] : memref<7x256xf32, #tpu.memory_space<vmem>>, vector<1x256xf32>
    %55 = vector.broadcast %54 : vector<1x256xf32> to vector<2x256xf32>
    %56 = arith.mulf %53, %55 : vector<2x256xf32>
    %c255_i32 = arith.constant 255 : i32
    %57 = tpu.dynamic_rotate %44 by %c255_i32 dim 1 : vector<2x256xf32>, i32 -> vector<2x256xf32>
    %c4 = arith.constant 4 : index
    %c0_22 = arith.constant 0 : index
    %58 = vector.load %arg6[%c4, %c0_22] : memref<7x256xf32, #tpu.memory_space<vmem>>, vector<1x256xf32>
    %59 = vector.broadcast %58 : vector<1x256xf32> to vector<2x256xf32>
    %60 = arith.mulf %57, %59 : vector<2x256xf32>
    %c254_i32 = arith.constant 254 : i32
    %61 = tpu.dynamic_rotate %44 by %c254_i32 dim 1 : vector<2x256xf32>, i32 -> vector<2x256xf32>
    %c5 = arith.constant 5 : index
    %c0_23 = arith.constant 0 : index
    %62 = vector.load %arg6[%c5, %c0_23] : memref<7x256xf32, #tpu.memory_space<vmem>>, vector<1x256xf32>
    %63 = vector.broadcast %62 : vector<1x256xf32> to vector<2x256xf32>
    %64 = arith.mulf %61, %63 : vector<2x256xf32>
    %c253_i32 = arith.constant 253 : i32
    %65 = tpu.dynamic_rotate %44 by %c253_i32 dim 1 : vector<2x256xf32>, i32 -> vector<2x256xf32>
    %c6 = arith.constant 6 : index
    %c0_24 = arith.constant 0 : index
    %66 = vector.load %arg6[%c6, %c0_24] : memref<7x256xf32, #tpu.memory_space<vmem>>, vector<1x256xf32>
    %67 = vector.broadcast %66 : vector<1x256xf32> to vector<2x256xf32>
    %68 = arith.mulf %65, %67 : vector<2x256xf32>
    %cst_25 = arith.constant 0.000000e+00 : f32
    %69 = vector.broadcast %cst_25 : f32 to vector<2x256xf32>
    %cst_26 = arith.constant 0.000000e+00 : f32
    %70 = vector.broadcast %cst_26 : f32 to vector<2x256xf32>
    %c48_i32 = arith.constant 48 : i32
    %71 = tpu.dynamic_rotate %48 by %c48_i32 dim 1 : vector<2x256xf32>, i32 -> vector<2x256xf32>
    %c0_27 = arith.constant 0 : index
    %c0_28 = arith.constant 0 : index
    %c0_29 = arith.constant 0 : index
    %72 = vector.load %arg4[%c0_27, %c0_28, %c0_29] : memref<49x2x1xf32, #tpu.memory_space<vmem>>, vector<1x2x1xf32>
    %73 = vector.shape_cast %72 : vector<1x2x1xf32> to vector<2x1xf32>
    %74 = vector.broadcast %73 : vector<2x1xf32> to vector<2x256xf32>
    %75 = arith.mulf %74, %71 : vector<2x256xf32>
    %76 = arith.addf %70, %75 : vector<2x256xf32>
    %c48_i32_30 = arith.constant 48 : i32
    %77 = tpu.dynamic_rotate %52 by %c48_i32_30 dim 1 : vector<2x256xf32>, i32 -> vector<2x256xf32>
    %c1_31 = arith.constant 1 : index
    %c0_32 = arith.constant 0 : index
    %c0_33 = arith.constant 0 : index
    %78 = vector.load %arg4[%c1_31, %c0_32, %c0_33] : memref<49x2x1xf32, #tpu.memory_space<vmem>>, vector<1x2x1xf32>
    %79 = vector.shape_cast %78 : vector<1x2x1xf32> to vector<2x1xf32>
    %80 = vector.broadcast %79 : vector<2x1xf32> to vector<2x256xf32>
    %81 = arith.mulf %80, %77 : vector<2x256xf32>
    %82 = arith.addf %76, %81 : vector<2x256xf32>
    %c48_i32_34 = arith.constant 48 : i32
    %83 = tpu.dynamic_rotate %56 by %c48_i32_34 dim 1 : vector<2x256xf32>, i32 -> vector<2x256xf32>
    %c2_35 = arith.constant 2 : index
    %c0_36 = arith.constant 0 : index
    %c0_37 = arith.constant 0 : index
    %84 = vector.load %arg4[%c2_35, %c0_36, %c0_37] : memref<49x2x1xf32, #tpu.memory_space<vmem>>, vector<1x2x1xf32>
    %85 = vector.shape_cast %84 : vector<1x2x1xf32> to vector<2x1xf32>
    %86 = vector.broadcast %85 : vector<2x1xf32> to vector<2x256xf32>
    %87 = arith.mulf %86, %83 : vector<2x256xf32>
    %88 = arith.addf %82, %87 : vector<2x256xf32>
    %c48_i32_38 = arith.constant 48 : i32
    %89 = tpu.dynamic_rotate %44 by %c48_i32_38 dim 1 : vector<2x256xf32>, i32 -> vector<2x256xf32>
    %c3 = arith.constant 3 : index
    %c0_39 = arith.constant 0 : index
    %c0_40 = arith.constant 0 : index
    %90 = vector.load %arg4[%c3, %c0_39, %c0_40] : memref<49x2x1xf32, #tpu.memory_space<vmem>>, vector<1x2x1xf32>
    %91 = vector.shape_cast %90 : vector<1x2x1xf32> to vector<2x1xf32>
    %92 = vector.broadcast %91 : vector<2x1xf32> to vector<2x256xf32>
    %93 = arith.mulf %92, %89 : vector<2x256xf32>
    %94 = arith.addf %88, %93 : vector<2x256xf32>
    %c48_i32_41 = arith.constant 48 : i32
    %95 = tpu.dynamic_rotate %60 by %c48_i32_41 dim 1 : vector<2x256xf32>, i32 -> vector<2x256xf32>
    %c4_42 = arith.constant 4 : index
    %c0_43 = arith.constant 0 : index
    %c0_44 = arith.constant 0 : index
    %96 = vector.load %arg4[%c4_42, %c0_43, %c0_44] : memref<49x2x1xf32, #tpu.memory_space<vmem>>, vector<1x2x1xf32>
    %97 = vector.shape_cast %96 : vector<1x2x1xf32> to vector<2x1xf32>
    %98 = vector.broadcast %97 : vector<2x1xf32> to vector<2x256xf32>
    %99 = arith.mulf %98, %95 : vector<2x256xf32>
    %100 = arith.addf %94, %99 : vector<2x256xf32>
    %c48_i32_45 = arith.constant 48 : i32
    %101 = tpu.dynamic_rotate %64 by %c48_i32_45 dim 1 : vector<2x256xf32>, i32 -> vector<2x256xf32>
    %c5_46 = arith.constant 5 : index
    %c0_47 = arith.constant 0 : index
    %c0_48 = arith.constant 0 : index
    %102 = vector.load %arg4[%c5_46, %c0_47, %c0_48] : memref<49x2x1xf32, #tpu.memory_space<vmem>>, vector<1x2x1xf32>
    %103 = vector.shape_cast %102 : vector<1x2x1xf32> to vector<2x1xf32>
    %104 = vector.broadcast %103 : vector<2x1xf32> to vector<2x256xf32>
    %105 = arith.mulf %104, %101 : vector<2x256xf32>
    %106 = arith.addf %100, %105 : vector<2x256xf32>
    %c48_i32_49 = arith.constant 48 : i32
    %107 = tpu.dynamic_rotate %68 by %c48_i32_49 dim 1 : vector<2x256xf32>, i32 -> vector<2x256xf32>
    %c6_50 = arith.constant 6 : index
    %c0_51 = arith.constant 0 : index
    %c0_52 = arith.constant 0 : index
    %108 = vector.load %arg4[%c6_50, %c0_51, %c0_52] : memref<49x2x1xf32, #tpu.memory_space<vmem>>, vector<1x2x1xf32>
    %109 = vector.shape_cast %108 : vector<1x2x1xf32> to vector<2x1xf32>
    %110 = vector.broadcast %109 : vector<2x1xf32> to vector<2x256xf32>
    %111 = arith.mulf %110, %107 : vector<2x256xf32>
    %112 = arith.addf %106, %111 : vector<2x256xf32>
    %c0_53 = arith.constant 0 : index
    %c0_54 = arith.constant 0 : index
    %113 = vector.load %arg5[%c0_53, %c0_54] : memref<7x256xf32, #tpu.memory_space<vmem>>, vector<1x256xf32>
    %114 = vector.broadcast %113 : vector<1x256xf32> to vector<2x256xf32>
    %115 = arith.mulf %112, %114 : vector<2x256xf32>
    %116 = arith.addf %69, %115 : vector<2x256xf32>
    %cst_55 = arith.constant 0.000000e+00 : f32
    %117 = vector.broadcast %cst_55 : f32 to vector<2x256xf32>
    %c32_i32 = arith.constant 32 : i32
    %118 = tpu.dynamic_rotate %48 by %c32_i32 dim 1 : vector<2x256xf32>, i32 -> vector<2x256xf32>
    %c7 = arith.constant 7 : index
    %c0_56 = arith.constant 0 : index
    %c0_57 = arith.constant 0 : index
    %119 = vector.load %arg4[%c7, %c0_56, %c0_57] : memref<49x2x1xf32, #tpu.memory_space<vmem>>, vector<1x2x1xf32>
    %120 = vector.shape_cast %119 : vector<1x2x1xf32> to vector<2x1xf32>
    %121 = vector.broadcast %120 : vector<2x1xf32> to vector<2x256xf32>
    %122 = arith.mulf %121, %118 : vector<2x256xf32>
    %123 = arith.addf %117, %122 : vector<2x256xf32>
    %c32_i32_58 = arith.constant 32 : i32
    %124 = tpu.dynamic_rotate %52 by %c32_i32_58 dim 1 : vector<2x256xf32>, i32 -> vector<2x256xf32>
    %c8 = arith.constant 8 : index
    %c0_59 = arith.constant 0 : index
    %c0_60 = arith.constant 0 : index
    %125 = vector.load %arg4[%c8, %c0_59, %c0_60] : memref<49x2x1xf32, #tpu.memory_space<vmem>>, vector<1x2x1xf32>
    %126 = vector.shape_cast %125 : vector<1x2x1xf32> to vector<2x1xf32>
    %127 = vector.broadcast %126 : vector<2x1xf32> to vector<2x256xf32>
    %128 = arith.mulf %127, %124 : vector<2x256xf32>
    %129 = arith.addf %123, %128 : vector<2x256xf32>
    %c32_i32_61 = arith.constant 32 : i32
    %130 = tpu.dynamic_rotate %56 by %c32_i32_61 dim 1 : vector<2x256xf32>, i32 -> vector<2x256xf32>
    %c9 = arith.constant 9 : index
    %c0_62 = arith.constant 0 : index
    %c0_63 = arith.constant 0 : index
    %131 = vector.load %arg4[%c9, %c0_62, %c0_63] : memref<49x2x1xf32, #tpu.memory_space<vmem>>, vector<1x2x1xf32>
    %132 = vector.shape_cast %131 : vector<1x2x1xf32> to vector<2x1xf32>
    %133 = vector.broadcast %132 : vector<2x1xf32> to vector<2x256xf32>
    %134 = arith.mulf %133, %130 : vector<2x256xf32>
    %135 = arith.addf %129, %134 : vector<2x256xf32>
    %c32_i32_64 = arith.constant 32 : i32
    %136 = tpu.dynamic_rotate %44 by %c32_i32_64 dim 1 : vector<2x256xf32>, i32 -> vector<2x256xf32>
    %c10 = arith.constant 10 : index
    %c0_65 = arith.constant 0 : index
    %c0_66 = arith.constant 0 : index
    %137 = vector.load %arg4[%c10, %c0_65, %c0_66] : memref<49x2x1xf32, #tpu.memory_space<vmem>>, vector<1x2x1xf32>
    %138 = vector.shape_cast %137 : vector<1x2x1xf32> to vector<2x1xf32>
    %139 = vector.broadcast %138 : vector<2x1xf32> to vector<2x256xf32>
    %140 = arith.mulf %139, %136 : vector<2x256xf32>
    %141 = arith.addf %135, %140 : vector<2x256xf32>
    %c32_i32_67 = arith.constant 32 : i32
    %142 = tpu.dynamic_rotate %60 by %c32_i32_67 dim 1 : vector<2x256xf32>, i32 -> vector<2x256xf32>
    %c11 = arith.constant 11 : index
    %c0_68 = arith.constant 0 : index
    %c0_69 = arith.constant 0 : index
    %143 = vector.load %arg4[%c11, %c0_68, %c0_69] : memref<49x2x1xf32, #tpu.memory_space<vmem>>, vector<1x2x1xf32>
    %144 = vector.shape_cast %143 : vector<1x2x1xf32> to vector<2x1xf32>
    %145 = vector.broadcast %144 : vector<2x1xf32> to vector<2x256xf32>
    %146 = arith.mulf %145, %142 : vector<2x256xf32>
    %147 = arith.addf %141, %146 : vector<2x256xf32>
    %c32_i32_70 = arith.constant 32 : i32
    %148 = tpu.dynamic_rotate %64 by %c32_i32_70 dim 1 : vector<2x256xf32>, i32 -> vector<2x256xf32>
    %c12 = arith.constant 12 : index
    %c0_71 = arith.constant 0 : index
    %c0_72 = arith.constant 0 : index
    %149 = vector.load %arg4[%c12, %c0_71, %c0_72] : memref<49x2x1xf32, #tpu.memory_space<vmem>>, vector<1x2x1xf32>
    %150 = vector.shape_cast %149 : vector<1x2x1xf32> to vector<2x1xf32>
    %151 = vector.broadcast %150 : vector<2x1xf32> to vector<2x256xf32>
    %152 = arith.mulf %151, %148 : vector<2x256xf32>
    %153 = arith.addf %147, %152 : vector<2x256xf32>
    %c32_i32_73 = arith.constant 32 : i32
    %154 = tpu.dynamic_rotate %68 by %c32_i32_73 dim 1 : vector<2x256xf32>, i32 -> vector<2x256xf32>
    %c13 = arith.constant 13 : index
    %c0_74 = arith.constant 0 : index
    %c0_75 = arith.constant 0 : index
    %155 = vector.load %arg4[%c13, %c0_74, %c0_75] : memref<49x2x1xf32, #tpu.memory_space<vmem>>, vector<1x2x1xf32>
    %156 = vector.shape_cast %155 : vector<1x2x1xf32> to vector<2x1xf32>
    %157 = vector.broadcast %156 : vector<2x1xf32> to vector<2x256xf32>
    %158 = arith.mulf %157, %154 : vector<2x256xf32>
    %159 = arith.addf %153, %158 : vector<2x256xf32>
    %c1_76 = arith.constant 1 : index
    %c0_77 = arith.constant 0 : index
    %160 = vector.load %arg5[%c1_76, %c0_77] : memref<7x256xf32, #tpu.memory_space<vmem>>, vector<1x256xf32>
    %161 = vector.broadcast %160 : vector<1x256xf32> to vector<2x256xf32>
    %162 = arith.mulf %159, %161 : vector<2x256xf32>
    %163 = arith.addf %116, %162 : vector<2x256xf32>
    %cst_78 = arith.constant 0.000000e+00 : f32
    %164 = vector.broadcast %cst_78 : f32 to vector<2x256xf32>
    %c16_i32 = arith.constant 16 : i32
    %165 = tpu.dynamic_rotate %48 by %c16_i32 dim 1 : vector<2x256xf32>, i32 -> vector<2x256xf32>
    %c14 = arith.constant 14 : index
    %c0_79 = arith.constant 0 : index
    %c0_80 = arith.constant 0 : index
    %166 = vector.load %arg4[%c14, %c0_79, %c0_80] : memref<49x2x1xf32, #tpu.memory_space<vmem>>, vector<1x2x1xf32>
    %167 = vector.shape_cast %166 : vector<1x2x1xf32> to vector<2x1xf32>
    %168 = vector.broadcast %167 : vector<2x1xf32> to vector<2x256xf32>
    %169 = arith.mulf %168, %165 : vector<2x256xf32>
    %170 = arith.addf %164, %169 : vector<2x256xf32>
    %c16_i32_81 = arith.constant 16 : i32
    %171 = tpu.dynamic_rotate %52 by %c16_i32_81 dim 1 : vector<2x256xf32>, i32 -> vector<2x256xf32>
    %c15 = arith.constant 15 : index
    %c0_82 = arith.constant 0 : index
    %c0_83 = arith.constant 0 : index
    %172 = vector.load %arg4[%c15, %c0_82, %c0_83] : memref<49x2x1xf32, #tpu.memory_space<vmem>>, vector<1x2x1xf32>
    %173 = vector.shape_cast %172 : vector<1x2x1xf32> to vector<2x1xf32>
    %174 = vector.broadcast %173 : vector<2x1xf32> to vector<2x256xf32>
    %175 = arith.mulf %174, %171 : vector<2x256xf32>
    %176 = arith.addf %170, %175 : vector<2x256xf32>
    %c16_i32_84 = arith.constant 16 : i32
    %177 = tpu.dynamic_rotate %56 by %c16_i32_84 dim 1 : vector<2x256xf32>, i32 -> vector<2x256xf32>
    %c16 = arith.constant 16 : index
    %c0_85 = arith.constant 0 : index
    %c0_86 = arith.constant 0 : index
    %178 = vector.load %arg4[%c16, %c0_85, %c0_86] : memref<49x2x1xf32, #tpu.memory_space<vmem>>, vector<1x2x1xf32>
    %179 = vector.shape_cast %178 : vector<1x2x1xf32> to vector<2x1xf32>
    %180 = vector.broadcast %179 : vector<2x1xf32> to vector<2x256xf32>
    %181 = arith.mulf %180, %177 : vector<2x256xf32>
    %182 = arith.addf %176, %181 : vector<2x256xf32>
    %c16_i32_87 = arith.constant 16 : i32
    %183 = tpu.dynamic_rotate %44 by %c16_i32_87 dim 1 : vector<2x256xf32>, i32 -> vector<2x256xf32>
    %c17 = arith.constant 17 : index
    %c0_88 = arith.constant 0 : index
    %c0_89 = arith.constant 0 : index
    %184 = vector.load %arg4[%c17, %c0_88, %c0_89] : memref<49x2x1xf32, #tpu.memory_space<vmem>>, vector<1x2x1xf32>
    %185 = vector.shape_cast %184 : vector<1x2x1xf32> to vector<2x1xf32>
    %186 = vector.broadcast %185 : vector<2x1xf32> to vector<2x256xf32>
    %187 = arith.mulf %186, %183 : vector<2x256xf32>
    %188 = arith.addf %182, %187 : vector<2x256xf32>
    %c16_i32_90 = arith.constant 16 : i32
    %189 = tpu.dynamic_rotate %60 by %c16_i32_90 dim 1 : vector<2x256xf32>, i32 -> vector<2x256xf32>
    %c18 = arith.constant 18 : index
    %c0_91 = arith.constant 0 : index
    %c0_92 = arith.constant 0 : index
    %190 = vector.load %arg4[%c18, %c0_91, %c0_92] : memref<49x2x1xf32, #tpu.memory_space<vmem>>, vector<1x2x1xf32>
    %191 = vector.shape_cast %190 : vector<1x2x1xf32> to vector<2x1xf32>
    %192 = vector.broadcast %191 : vector<2x1xf32> to vector<2x256xf32>
    %193 = arith.mulf %192, %189 : vector<2x256xf32>
    %194 = arith.addf %188, %193 : vector<2x256xf32>
    %c16_i32_93 = arith.constant 16 : i32
    %195 = tpu.dynamic_rotate %64 by %c16_i32_93 dim 1 : vector<2x256xf32>, i32 -> vector<2x256xf32>
    %c19 = arith.constant 19 : index
    %c0_94 = arith.constant 0 : index
    %c0_95 = arith.constant 0 : index
    %196 = vector.load %arg4[%c19, %c0_94, %c0_95] : memref<49x2x1xf32, #tpu.memory_space<vmem>>, vector<1x2x1xf32>
    %197 = vector.shape_cast %196 : vector<1x2x1xf32> to vector<2x1xf32>
    %198 = vector.broadcast %197 : vector<2x1xf32> to vector<2x256xf32>
    %199 = arith.mulf %198, %195 : vector<2x256xf32>
    %200 = arith.addf %194, %199 : vector<2x256xf32>
    %c16_i32_96 = arith.constant 16 : i32
    %201 = tpu.dynamic_rotate %68 by %c16_i32_96 dim 1 : vector<2x256xf32>, i32 -> vector<2x256xf32>
    %c20 = arith.constant 20 : index
    %c0_97 = arith.constant 0 : index
    %c0_98 = arith.constant 0 : index
    %202 = vector.load %arg4[%c20, %c0_97, %c0_98] : memref<49x2x1xf32, #tpu.memory_space<vmem>>, vector<1x2x1xf32>
    %203 = vector.shape_cast %202 : vector<1x2x1xf32> to vector<2x1xf32>
    %204 = vector.broadcast %203 : vector<2x1xf32> to vector<2x256xf32>
    %205 = arith.mulf %204, %201 : vector<2x256xf32>
    %206 = arith.addf %200, %205 : vector<2x256xf32>
    %c2_99 = arith.constant 2 : index
    %c0_100 = arith.constant 0 : index
    %207 = vector.load %arg5[%c2_99, %c0_100] : memref<7x256xf32, #tpu.memory_space<vmem>>, vector<1x256xf32>
    %208 = vector.broadcast %207 : vector<1x256xf32> to vector<2x256xf32>
    %209 = arith.mulf %206, %208 : vector<2x256xf32>
    %210 = arith.addf %163, %209 : vector<2x256xf32>
    %cst_101 = arith.constant 0.000000e+00 : f32
    %211 = vector.broadcast %cst_101 : f32 to vector<2x256xf32>
    %c21 = arith.constant 21 : index
    %c0_102 = arith.constant 0 : index
    %c0_103 = arith.constant 0 : index
    %212 = vector.load %arg4[%c21, %c0_102, %c0_103] : memref<49x2x1xf32, #tpu.memory_space<vmem>>, vector<1x2x1xf32>
    %213 = vector.shape_cast %212 : vector<1x2x1xf32> to vector<2x1xf32>
    %214 = vector.broadcast %213 : vector<2x1xf32> to vector<2x256xf32>
    %215 = arith.mulf %214, %48 : vector<2x256xf32>
    %216 = arith.addf %211, %215 : vector<2x256xf32>
    %c22 = arith.constant 22 : index
    %c0_104 = arith.constant 0 : index
    %c0_105 = arith.constant 0 : index
    %217 = vector.load %arg4[%c22, %c0_104, %c0_105] : memref<49x2x1xf32, #tpu.memory_space<vmem>>, vector<1x2x1xf32>
    %218 = vector.shape_cast %217 : vector<1x2x1xf32> to vector<2x1xf32>
    %219 = vector.broadcast %218 : vector<2x1xf32> to vector<2x256xf32>
    %220 = arith.mulf %219, %52 : vector<2x256xf32>
    %221 = arith.addf %216, %220 : vector<2x256xf32>
    %c23 = arith.constant 23 : index
    %c0_106 = arith.constant 0 : index
    %c0_107 = arith.constant 0 : index
    %222 = vector.load %arg4[%c23, %c0_106, %c0_107] : memref<49x2x1xf32, #tpu.memory_space<vmem>>, vector<1x2x1xf32>
    %223 = vector.shape_cast %222 : vector<1x2x1xf32> to vector<2x1xf32>
    %224 = vector.broadcast %223 : vector<2x1xf32> to vector<2x256xf32>
    %225 = arith.mulf %224, %56 : vector<2x256xf32>
    %226 = arith.addf %221, %225 : vector<2x256xf32>
    %c24 = arith.constant 24 : index
    %c0_108 = arith.constant 0 : index
    %c0_109 = arith.constant 0 : index
    %227 = vector.load %arg4[%c24, %c0_108, %c0_109] : memref<49x2x1xf32, #tpu.memory_space<vmem>>, vector<1x2x1xf32>
    %228 = vector.shape_cast %227 : vector<1x2x1xf32> to vector<2x1xf32>
    %229 = vector.broadcast %228 : vector<2x1xf32> to vector<2x256xf32>
    %230 = arith.mulf %229, %44 : vector<2x256xf32>
    %231 = arith.addf %226, %230 : vector<2x256xf32>
    %c25 = arith.constant 25 : index
    %c0_110 = arith.constant 0 : index
    %c0_111 = arith.constant 0 : index
    %232 = vector.load %arg4[%c25, %c0_110, %c0_111] : memref<49x2x1xf32, #tpu.memory_space<vmem>>, vector<1x2x1xf32>
    %233 = vector.shape_cast %232 : vector<1x2x1xf32> to vector<2x1xf32>
    %234 = vector.broadcast %233 : vector<2x1xf32> to vector<2x256xf32>
    %235 = arith.mulf %234, %60 : vector<2x256xf32>
    %236 = arith.addf %231, %235 : vector<2x256xf32>
    %c26 = arith.constant 26 : index
    %c0_112 = arith.constant 0 : index
    %c0_113 = arith.constant 0 : index
    %237 = vector.load %arg4[%c26, %c0_112, %c0_113] : memref<49x2x1xf32, #tpu.memory_space<vmem>>, vector<1x2x1xf32>
    %238 = vector.shape_cast %237 : vector<1x2x1xf32> to vector<2x1xf32>
    %239 = vector.broadcast %238 : vector<2x1xf32> to vector<2x256xf32>
    %240 = arith.mulf %239, %64 : vector<2x256xf32>
    %241 = arith.addf %236, %240 : vector<2x256xf32>
    %c27 = arith.constant 27 : index
    %c0_114 = arith.constant 0 : index
    %c0_115 = arith.constant 0 : index
    %242 = vector.load %arg4[%c27, %c0_114, %c0_115] : memref<49x2x1xf32, #tpu.memory_space<vmem>>, vector<1x2x1xf32>
    %243 = vector.shape_cast %242 : vector<1x2x1xf32> to vector<2x1xf32>
    %244 = vector.broadcast %243 : vector<2x1xf32> to vector<2x256xf32>
    %245 = arith.mulf %244, %68 : vector<2x256xf32>
    %246 = arith.addf %241, %245 : vector<2x256xf32>
    %247 = arith.addf %210, %246 : vector<2x256xf32>
    %cst_116 = arith.constant 0.000000e+00 : f32
    %248 = vector.broadcast %cst_116 : f32 to vector<2x256xf32>
    %c240_i32 = arith.constant 240 : i32
    %249 = tpu.dynamic_rotate %48 by %c240_i32 dim 1 : vector<2x256xf32>, i32 -> vector<2x256xf32>
    %c28 = arith.constant 28 : index
    %c0_117 = arith.constant 0 : index
    %c0_118 = arith.constant 0 : index
    %250 = vector.load %arg4[%c28, %c0_117, %c0_118] : memref<49x2x1xf32, #tpu.memory_space<vmem>>, vector<1x2x1xf32>
    %251 = vector.shape_cast %250 : vector<1x2x1xf32> to vector<2x1xf32>
    %252 = vector.broadcast %251 : vector<2x1xf32> to vector<2x256xf32>
    %253 = arith.mulf %252, %249 : vector<2x256xf32>
    %254 = arith.addf %248, %253 : vector<2x256xf32>
    %c240_i32_119 = arith.constant 240 : i32
    %255 = tpu.dynamic_rotate %52 by %c240_i32_119 dim 1 : vector<2x256xf32>, i32 -> vector<2x256xf32>
    %c29 = arith.constant 29 : index
    %c0_120 = arith.constant 0 : index
    %c0_121 = arith.constant 0 : index
    %256 = vector.load %arg4[%c29, %c0_120, %c0_121] : memref<49x2x1xf32, #tpu.memory_space<vmem>>, vector<1x2x1xf32>
    %257 = vector.shape_cast %256 : vector<1x2x1xf32> to vector<2x1xf32>
    %258 = vector.broadcast %257 : vector<2x1xf32> to vector<2x256xf32>
    %259 = arith.mulf %258, %255 : vector<2x256xf32>
    %260 = arith.addf %254, %259 : vector<2x256xf32>
    %c240_i32_122 = arith.constant 240 : i32
    %261 = tpu.dynamic_rotate %56 by %c240_i32_122 dim 1 : vector<2x256xf32>, i32 -> vector<2x256xf32>
    %c30 = arith.constant 30 : index
    %c0_123 = arith.constant 0 : index
    %c0_124 = arith.constant 0 : index
    %262 = vector.load %arg4[%c30, %c0_123, %c0_124] : memref<49x2x1xf32, #tpu.memory_space<vmem>>, vector<1x2x1xf32>
    %263 = vector.shape_cast %262 : vector<1x2x1xf32> to vector<2x1xf32>
    %264 = vector.broadcast %263 : vector<2x1xf32> to vector<2x256xf32>
    %265 = arith.mulf %264, %261 : vector<2x256xf32>
    %266 = arith.addf %260, %265 : vector<2x256xf32>
    %c240_i32_125 = arith.constant 240 : i32
    %267 = tpu.dynamic_rotate %44 by %c240_i32_125 dim 1 : vector<2x256xf32>, i32 -> vector<2x256xf32>
    %c31 = arith.constant 31 : index
    %c0_126 = arith.constant 0 : index
    %c0_127 = arith.constant 0 : index
    %268 = vector.load %arg4[%c31, %c0_126, %c0_127] : memref<49x2x1xf32, #tpu.memory_space<vmem>>, vector<1x2x1xf32>
    %269 = vector.shape_cast %268 : vector<1x2x1xf32> to vector<2x1xf32>
    %270 = vector.broadcast %269 : vector<2x1xf32> to vector<2x256xf32>
    %271 = arith.mulf %270, %267 : vector<2x256xf32>
    %272 = arith.addf %266, %271 : vector<2x256xf32>
    %c240_i32_128 = arith.constant 240 : i32
    %273 = tpu.dynamic_rotate %60 by %c240_i32_128 dim 1 : vector<2x256xf32>, i32 -> vector<2x256xf32>
    %c32 = arith.constant 32 : index
    %c0_129 = arith.constant 0 : index
    %c0_130 = arith.constant 0 : index
    %274 = vector.load %arg4[%c32, %c0_129, %c0_130] : memref<49x2x1xf32, #tpu.memory_space<vmem>>, vector<1x2x1xf32>
    %275 = vector.shape_cast %274 : vector<1x2x1xf32> to vector<2x1xf32>
    %276 = vector.broadcast %275 : vector<2x1xf32> to vector<2x256xf32>
    %277 = arith.mulf %276, %273 : vector<2x256xf32>
    %278 = arith.addf %272, %277 : vector<2x256xf32>
    %c240_i32_131 = arith.constant 240 : i32
    %279 = tpu.dynamic_rotate %64 by %c240_i32_131 dim 1 : vector<2x256xf32>, i32 -> vector<2x256xf32>
    %c33 = arith.constant 33 : index
    %c0_132 = arith.constant 0 : index
    %c0_133 = arith.constant 0 : index
    %280 = vector.load %arg4[%c33, %c0_132, %c0_133] : memref<49x2x1xf32, #tpu.memory_space<vmem>>, vector<1x2x1xf32>
    %281 = vector.shape_cast %280 : vector<1x2x1xf32> to vector<2x1xf32>
    %282 = vector.broadcast %281 : vector<2x1xf32> to vector<2x256xf32>
    %283 = arith.mulf %282, %279 : vector<2x256xf32>
    %284 = arith.addf %278, %283 : vector<2x256xf32>
    %c240_i32_134 = arith.constant 240 : i32
    %285 = tpu.dynamic_rotate %68 by %c240_i32_134 dim 1 : vector<2x256xf32>, i32 -> vector<2x256xf32>
    %c34 = arith.constant 34 : index
    %c0_135 = arith.constant 0 : index
    %c0_136 = arith.constant 0 : index
    %286 = vector.load %arg4[%c34, %c0_135, %c0_136] : memref<49x2x1xf32, #tpu.memory_space<vmem>>, vector<1x2x1xf32>
    %287 = vector.shape_cast %286 : vector<1x2x1xf32> to vector<2x1xf32>
    %288 = vector.broadcast %287 : vector<2x1xf32> to vector<2x256xf32>
    %289 = arith.mulf %288, %285 : vector<2x256xf32>
    %290 = arith.addf %284, %289 : vector<2x256xf32>
    %c4_137 = arith.constant 4 : index
    %c0_138 = arith.constant 0 : index
    %291 = vector.load %arg5[%c4_137, %c0_138] : memref<7x256xf32, #tpu.memory_space<vmem>>, vector<1x256xf32>
    %292 = vector.broadcast %291 : vector<1x256xf32> to vector<2x256xf32>
    %293 = arith.mulf %290, %292 : vector<2x256xf32>
    %294 = arith.addf %247, %293 : vector<2x256xf32>
    %cst_139 = arith.constant 0.000000e+00 : f32
    %295 = vector.broadcast %cst_139 : f32 to vector<2x256xf32>
    %c224_i32 = arith.constant 224 : i32
    %296 = tpu.dynamic_rotate %48 by %c224_i32 dim 1 : vector<2x256xf32>, i32 -> vector<2x256xf32>
    %c35 = arith.constant 35 : index
    %c0_140 = arith.constant 0 : index
    %c0_141 = arith.constant 0 : index
    %297 = vector.load %arg4[%c35, %c0_140, %c0_141] : memref<49x2x1xf32, #tpu.memory_space<vmem>>, vector<1x2x1xf32>
    %298 = vector.shape_cast %297 : vector<1x2x1xf32> to vector<2x1xf32>
    %299 = vector.broadcast %298 : vector<2x1xf32> to vector<2x256xf32>
    %300 = arith.mulf %299, %296 : vector<2x256xf32>
    %301 = arith.addf %295, %300 : vector<2x256xf32>
    %c224_i32_142 = arith.constant 224 : i32
    %302 = tpu.dynamic_rotate %52 by %c224_i32_142 dim 1 : vector<2x256xf32>, i32 -> vector<2x256xf32>
    %c36 = arith.constant 36 : index
    %c0_143 = arith.constant 0 : index
    %c0_144 = arith.constant 0 : index
    %303 = vector.load %arg4[%c36, %c0_143, %c0_144] : memref<49x2x1xf32, #tpu.memory_space<vmem>>, vector<1x2x1xf32>
    %304 = vector.shape_cast %303 : vector<1x2x1xf32> to vector<2x1xf32>
    %305 = vector.broadcast %304 : vector<2x1xf32> to vector<2x256xf32>
    %306 = arith.mulf %305, %302 : vector<2x256xf32>
    %307 = arith.addf %301, %306 : vector<2x256xf32>
    %c224_i32_145 = arith.constant 224 : i32
    %308 = tpu.dynamic_rotate %56 by %c224_i32_145 dim 1 : vector<2x256xf32>, i32 -> vector<2x256xf32>
    %c37 = arith.constant 37 : index
    %c0_146 = arith.constant 0 : index
    %c0_147 = arith.constant 0 : index
    %309 = vector.load %arg4[%c37, %c0_146, %c0_147] : memref<49x2x1xf32, #tpu.memory_space<vmem>>, vector<1x2x1xf32>
    %310 = vector.shape_cast %309 : vector<1x2x1xf32> to vector<2x1xf32>
    %311 = vector.broadcast %310 : vector<2x1xf32> to vector<2x256xf32>
    %312 = arith.mulf %311, %308 : vector<2x256xf32>
    %313 = arith.addf %307, %312 : vector<2x256xf32>
    %c224_i32_148 = arith.constant 224 : i32
    %314 = tpu.dynamic_rotate %44 by %c224_i32_148 dim 1 : vector<2x256xf32>, i32 -> vector<2x256xf32>
    %c38 = arith.constant 38 : index
    %c0_149 = arith.constant 0 : index
    %c0_150 = arith.constant 0 : index
    %315 = vector.load %arg4[%c38, %c0_149, %c0_150] : memref<49x2x1xf32, #tpu.memory_space<vmem>>, vector<1x2x1xf32>
    %316 = vector.shape_cast %315 : vector<1x2x1xf32> to vector<2x1xf32>
    %317 = vector.broadcast %316 : vector<2x1xf32> to vector<2x256xf32>
    %318 = arith.mulf %317, %314 : vector<2x256xf32>
    %319 = arith.addf %313, %318 : vector<2x256xf32>
    %c224_i32_151 = arith.constant 224 : i32
    %320 = tpu.dynamic_rotate %60 by %c224_i32_151 dim 1 : vector<2x256xf32>, i32 -> vector<2x256xf32>
    %c39 = arith.constant 39 : index
    %c0_152 = arith.constant 0 : index
    %c0_153 = arith.constant 0 : index
    %321 = vector.load %arg4[%c39, %c0_152, %c0_153] : memref<49x2x1xf32, #tpu.memory_space<vmem>>, vector<1x2x1xf32>
    %322 = vector.shape_cast %321 : vector<1x2x1xf32> to vector<2x1xf32>
    %323 = vector.broadcast %322 : vector<2x1xf32> to vector<2x256xf32>
    %324 = arith.mulf %323, %320 : vector<2x256xf32>
    %325 = arith.addf %319, %324 : vector<2x256xf32>
    %c224_i32_154 = arith.constant 224 : i32
    %326 = tpu.dynamic_rotate %64 by %c224_i32_154 dim 1 : vector<2x256xf32>, i32 -> vector<2x256xf32>
    %c40 = arith.constant 40 : index
    %c0_155 = arith.constant 0 : index
    %c0_156 = arith.constant 0 : index
    %327 = vector.load %arg4[%c40, %c0_155, %c0_156] : memref<49x2x1xf32, #tpu.memory_space<vmem>>, vector<1x2x1xf32>
    %328 = vector.shape_cast %327 : vector<1x2x1xf32> to vector<2x1xf32>
    %329 = vector.broadcast %328 : vector<2x1xf32> to vector<2x256xf32>
    %330 = arith.mulf %329, %326 : vector<2x256xf32>
    %331 = arith.addf %325, %330 : vector<2x256xf32>
    %c224_i32_157 = arith.constant 224 : i32
    %332 = tpu.dynamic_rotate %68 by %c224_i32_157 dim 1 : vector<2x256xf32>, i32 -> vector<2x256xf32>
    %c41 = arith.constant 41 : index
    %c0_158 = arith.constant 0 : index
    %c0_159 = arith.constant 0 : index
    %333 = vector.load %arg4[%c41, %c0_158, %c0_159] : memref<49x2x1xf32, #tpu.memory_space<vmem>>, vector<1x2x1xf32>
    %334 = vector.shape_cast %333 : vector<1x2x1xf32> to vector<2x1xf32>
    %335 = vector.broadcast %334 : vector<2x1xf32> to vector<2x256xf32>
    %336 = arith.mulf %335, %332 : vector<2x256xf32>
    %337 = arith.addf %331, %336 : vector<2x256xf32>
    %c5_160 = arith.constant 5 : index
    %c0_161 = arith.constant 0 : index
    %338 = vector.load %arg5[%c5_160, %c0_161] : memref<7x256xf32, #tpu.memory_space<vmem>>, vector<1x256xf32>
    %339 = vector.broadcast %338 : vector<1x256xf32> to vector<2x256xf32>
    %340 = arith.mulf %337, %339 : vector<2x256xf32>
    %341 = arith.addf %294, %340 : vector<2x256xf32>
    %cst_162 = arith.constant 0.000000e+00 : f32
    %342 = vector.broadcast %cst_162 : f32 to vector<2x256xf32>
    %c208_i32 = arith.constant 208 : i32
    %343 = tpu.dynamic_rotate %48 by %c208_i32 dim 1 : vector<2x256xf32>, i32 -> vector<2x256xf32>
    %c42 = arith.constant 42 : index
    %c0_163 = arith.constant 0 : index
    %c0_164 = arith.constant 0 : index
    %344 = vector.load %arg4[%c42, %c0_163, %c0_164] : memref<49x2x1xf32, #tpu.memory_space<vmem>>, vector<1x2x1xf32>
    %345 = vector.shape_cast %344 : vector<1x2x1xf32> to vector<2x1xf32>
    %346 = vector.broadcast %345 : vector<2x1xf32> to vector<2x256xf32>
    %347 = arith.mulf %346, %343 : vector<2x256xf32>
    %348 = arith.addf %342, %347 : vector<2x256xf32>
    %c208_i32_165 = arith.constant 208 : i32
    %349 = tpu.dynamic_rotate %52 by %c208_i32_165 dim 1 : vector<2x256xf32>, i32 -> vector<2x256xf32>
    %c43 = arith.constant 43 : index
    %c0_166 = arith.constant 0 : index
    %c0_167 = arith.constant 0 : index
    %350 = vector.load %arg4[%c43, %c0_166, %c0_167] : memref<49x2x1xf32, #tpu.memory_space<vmem>>, vector<1x2x1xf32>
    %351 = vector.shape_cast %350 : vector<1x2x1xf32> to vector<2x1xf32>
    %352 = vector.broadcast %351 : vector<2x1xf32> to vector<2x256xf32>
    %353 = arith.mulf %352, %349 : vector<2x256xf32>
    %354 = arith.addf %348, %353 : vector<2x256xf32>
    %c208_i32_168 = arith.constant 208 : i32
    %355 = tpu.dynamic_rotate %56 by %c208_i32_168 dim 1 : vector<2x256xf32>, i32 -> vector<2x256xf32>
    %c44 = arith.constant 44 : index
    %c0_169 = arith.constant 0 : index
    %c0_170 = arith.constant 0 : index
    %356 = vector.load %arg4[%c44, %c0_169, %c0_170] : memref<49x2x1xf32, #tpu.memory_space<vmem>>, vector<1x2x1xf32>
    %357 = vector.shape_cast %356 : vector<1x2x1xf32> to vector<2x1xf32>
    %358 = vector.broadcast %357 : vector<2x1xf32> to vector<2x256xf32>
    %359 = arith.mulf %358, %355 : vector<2x256xf32>
    %360 = arith.addf %354, %359 : vector<2x256xf32>
    %c208_i32_171 = arith.constant 208 : i32
    %361 = tpu.dynamic_rotate %44 by %c208_i32_171 dim 1 : vector<2x256xf32>, i32 -> vector<2x256xf32>
    %c45 = arith.constant 45 : index
    %c0_172 = arith.constant 0 : index
    %c0_173 = arith.constant 0 : index
    %362 = vector.load %arg4[%c45, %c0_172, %c0_173] : memref<49x2x1xf32, #tpu.memory_space<vmem>>, vector<1x2x1xf32>
    %363 = vector.shape_cast %362 : vector<1x2x1xf32> to vector<2x1xf32>
    %364 = vector.broadcast %363 : vector<2x1xf32> to vector<2x256xf32>
    %365 = arith.mulf %364, %361 : vector<2x256xf32>
    %366 = arith.addf %360, %365 : vector<2x256xf32>
    %c208_i32_174 = arith.constant 208 : i32
    %367 = tpu.dynamic_rotate %60 by %c208_i32_174 dim 1 : vector<2x256xf32>, i32 -> vector<2x256xf32>
    %c46 = arith.constant 46 : index
    %c0_175 = arith.constant 0 : index
    %c0_176 = arith.constant 0 : index
    %368 = vector.load %arg4[%c46, %c0_175, %c0_176] : memref<49x2x1xf32, #tpu.memory_space<vmem>>, vector<1x2x1xf32>
    %369 = vector.shape_cast %368 : vector<1x2x1xf32> to vector<2x1xf32>
    %370 = vector.broadcast %369 : vector<2x1xf32> to vector<2x256xf32>
    %371 = arith.mulf %370, %367 : vector<2x256xf32>
    %372 = arith.addf %366, %371 : vector<2x256xf32>
    %c208_i32_177 = arith.constant 208 : i32
    %373 = tpu.dynamic_rotate %64 by %c208_i32_177 dim 1 : vector<2x256xf32>, i32 -> vector<2x256xf32>
    %c47 = arith.constant 47 : index
    %c0_178 = arith.constant 0 : index
    %c0_179 = arith.constant 0 : index
    %374 = vector.load %arg4[%c47, %c0_178, %c0_179] : memref<49x2x1xf32, #tpu.memory_space<vmem>>, vector<1x2x1xf32>
    %375 = vector.shape_cast %374 : vector<1x2x1xf32> to vector<2x1xf32>
    %376 = vector.broadcast %375 : vector<2x1xf32> to vector<2x256xf32>
    %377 = arith.mulf %376, %373 : vector<2x256xf32>
    %378 = arith.addf %372, %377 : vector<2x256xf32>
    %c208_i32_180 = arith.constant 208 : i32
    %379 = tpu.dynamic_rotate %68 by %c208_i32_180 dim 1 : vector<2x256xf32>, i32 -> vector<2x256xf32>
    %c48 = arith.constant 48 : index
    %c0_181 = arith.constant 0 : index
    %c0_182 = arith.constant 0 : index
    %380 = vector.load %arg4[%c48, %c0_181, %c0_182] : memref<49x2x1xf32, #tpu.memory_space<vmem>>, vector<1x2x1xf32>
    %381 = vector.shape_cast %380 : vector<1x2x1xf32> to vector<2x1xf32>
    %382 = vector.broadcast %381 : vector<2x1xf32> to vector<2x256xf32>
    %383 = arith.mulf %382, %379 : vector<2x256xf32>
    %384 = arith.addf %378, %383 : vector<2x256xf32>
    %c6_183 = arith.constant 6 : index
    %c0_184 = arith.constant 0 : index
    %385 = vector.load %arg5[%c6_183, %c0_184] : memref<7x256xf32, #tpu.memory_space<vmem>>, vector<1x256xf32>
    %386 = vector.broadcast %385 : vector<1x256xf32> to vector<2x256xf32>
    %387 = arith.mulf %384, %386 : vector<2x256xf32>
    %388 = arith.addf %341, %387 : vector<2x256xf32>
    %389 = vector.extract_strided_slice %388 {offsets = [0, 0], sizes = [1, 256], strides = [1, 1]} : vector<2x256xf32> to vector<1x256xf32>
    %390 = vector.extract_strided_slice %388 {offsets = [1, 0], sizes = [1, 256], strides = [1, 1]} : vector<2x256xf32> to vector<1x256xf32>
    %391 = arith.addf %389, %390 : vector<1x256xf32>
    %c0_185 = arith.constant 0 : index
    %392 = memref.load %arg7[%c0_185] : memref<1xf32, #tpu.memory_space<smem>>
    %393 = vector.broadcast %392 : f32 to vector<1x256xf32>
    %394 = arith.addf %391, %393 : vector<1x256xf32>
    %395 = arith.negf %394 : vector<1x256xf32>
    %396 = math.exp %395 : vector<1x256xf32>
    %cst_186 = arith.constant 1.000000e+00 : f32
    %397 = vector.broadcast %cst_186 : f32 to vector<1x256xf32>
    %398 = arith.addf %397, %396 : vector<1x256xf32>
    %399 = arith.divf %397, %398 : vector<1x256xf32>
    %400 = vector.broadcast %399 : vector<1x256xf32> to vector<32x256xf32>
    %401 = arith.mulf %37, %400 : vector<32x256xf32>
    %c0_187 = arith.constant 0 : index
    %c0_188 = arith.constant 0 : index
    %c0_189 = arith.constant 0 : index
    %402 = vector.load %arg8[%c0_187, %c0_188, %c0_189] : memref<1x32x256xf32, #tpu.memory_space<vmem>>, vector<1x32x256xf32>
    %403 = vector.shape_cast %402 : vector<1x32x256xf32> to vector<32x256xf32>
    %404 = vector.shape_cast %401 : vector<32x256xf32> to vector<1x32x256xf32>
    tpu.vector_store %arg8[%c0_187, %c0_188, %c0_189], %404 {strides = array<i32>} : memref<1x32x256xf32, #tpu.memory_space<vmem>>, vector<1x32x256xf32>,
    return
  }
  func.func @transform_0(%arg0: i32) -> (i32, i32, i32) {
    %c0_i32 = arith.constant 0 : i32
    %c0_i32_0 = arith.constant 0 : i32
    %c0_i32_1 = arith.constant 0 : i32
    return %arg0, %c0_i32, %c0_i32_0 : i32, i32, i32
  }
  func.func @transform_1(%arg0: i32) -> (i32, i32) {
    %c0_i32 = arith.constant 0 : i32
    %c0_i32_0 = arith.constant 0 : i32
    %c0_i32_1 = arith.constant 0 : i32
    return %c0_i32, %c0_i32_0 : i32, i32
  }
  func.func @transform_2(%arg0: i32) -> (i32, i32) {
    %c0_i32 = arith.constant 0 : i32
    %c0_i32_0 = arith.constant 0 : i32
    %c0_i32_1 = arith.constant 0 : i32
    return %c0_i32, %c0_i32_0 : i32, i32
  }
  func.func @transform_3(%arg0: i32) -> (i32, i32, i32) {
    %c0_i32 = arith.constant 0 : i32
    %c0_i32_0 = arith.constant 0 : i32
    %c0_i32_1 = arith.constant 0 : i32
    %c0_i32_2 = arith.constant 0 : i32
    return %c0_i32, %c0_i32_0, %c0_i32_1 : i32, i32, i32
  }
  func.func @transform_4(%arg0: i32) -> (i32, i32) {
    %c0_i32 = arith.constant 0 : i32
    %c0_i32_0 = arith.constant 0 : i32
    %c0_i32_1 = arith.constant 0 : i32
    return %c0_i32, %c0_i32_0 : i32, i32
  }
  func.func @transform_5(%arg0: i32) -> (i32, i32) {
    %c0_i32 = arith.constant 0 : i32
    %c0_i32_0 = arith.constant 0 : i32
    %c0_i32_1 = arith.constant 0 : i32
    return %c0_i32, %c0_i32_0 : i32, i32
  }
  func.func @transform_6(%arg0: i32) -> i32 {
    %c0_i32 = arith.constant 0 : i32
    %c0_i32_0 = arith.constant 0 : i32
    return %c0_i32 : i32
  }
  func.func @transform_7(%arg0: i32) -> (i32, i32, i32) {
    %c0_i32 = arith.constant 0 : i32
    %c0_i32_0 = arith.constant 0 : i32
    %c0_i32_1 = arith.constant 0 : i32
    return %arg0, %c0_i32, %c0_i32_0 : i32, i32, i32
  }
}

</mosaic_0001>

<llo_original>
// kernel: cbam_pallas.1
$region0: #{cbam_pallas.1}
  #allocation0 [shape = 'u32[]', space=smem, size = 0x4, offset = 0x4, fixed_abs, tag = 'smem constant byte address 0x4 - core index']
  #allocation1 [shape = 'u32[144,128]{1,0:T(1,128)}', space=vmem, size = 0x12000, scoped, tag = 'internal scratch']
  #allocation2 [shape = 'f32[1]{0:T(128)S(6)}', space=smem, size = 0x200, scoped, tag = 'scoped memory for cbam_pallas.1']
  %s0 = inlined_call_operand.vmem [shape: f32[2,32,256], index: 0, kind: input, shape index: {}]
  %s1 = inlined_call_operand.vmem [shape: f32[32,2], index: 1, kind: input, shape index: {}]
  %s2 = inlined_call_operand.vmem [shape: f32[32,2], index: 2, kind: input, shape index: {}]
  %s3 = inlined_call_operand.vmem [shape: f32[49,2,1], index: 3, kind: input, shape index: {}]
  %s4 = inlined_call_operand.vmem [shape: f32[7,256], index: 4, kind: input, shape index: {}]
  %s5 = inlined_call_operand.vmem [shape: f32[7,256], index: 5, kind: input, shape index: {}]
  %s6 = inlined_call_operand.<no memory space> [shape: f32[1], index: 6, kind: input, shape index: {}]
  %s7 = inlined_call_operand.vmem [shape: f32[2,32,256], index: 7, kind: output, shape index: {}]
  %s8 = sld [smem:[#allocation0]]
  $region61: #{cbam_pallas.1} parent=0
    _
  %s10 = ssub.s32 1, %s8
  %s11 = scalar_select 0, %s10, %s8
  %12 = sst [smem:[#allocation2]] %s6
  loop: start=0, step=1, limit=4
  $region2: #{cbam_pallas.1} parent=0 // loop_pre_header
    _
  $region3: #{cbam_pallas.1} parent=0 // loop_header
    %s14 = sphi 0, %s18
    %p15 = scmp.ge.s32.totalorder %s14, 4
    %s24 = sphi 0, %s26
    %s27 = sphi 0, %s24
    %s28 = sphi 0, %s27
    %s44 = sphi 0, %s28
    %s48 = sphi 0, %s48
    %s50 = sphi 0, %s48
    %s51 = sphi 0, %s50
    %s65 = sphi 0, %s51
    %s69 = sphi 0, %s69
    %s71 = sphi 0, %s69
    %s72 = sphi 0, %s71
    %s86 = sphi 0, %s72
    %s90 = sphi 0, %s90
    %s92 = sphi 0, %s90
    %s93 = sphi 0, %s92
    %s107 = sphi 0, %s93
    %s111 = sphi 0, %s111
    %s113 = sphi 0, %s111
    %s114 = sphi 0, %s113
    %s128 = sphi 0, %s114
    %s132 = sphi 0, %s132
    %s134 = sphi 0, %s132
    %s135 = sphi 0, %s134
    %s149 = sphi 0, %s135
    %s153 = sphi 0, %s153
    %s155 = sphi 0, %s153
    %s156 = sphi 0, %s155
    %s170 = sphi 0, %s156
    %s176 = sphi 0, %s178
    %s179 = sphi 0, %s176
    %s180 = sphi 0, %s179
    %s196 = sphi 0, %s180
  $region4: #{cbam_pallas.1} parent=0 // loop_header_branch
    %17 = sbr.rel (%p15) target = $region8
  $region5: #{cbam_pallas.1} parent=0 // loop_body
    %s19 = ssub.s32 %s14, 1
    %s20 = ssub.s32 %s14, 2
    %s21 = sadd.s32 %s14, 1
    %s22 = ssub.s32 %s14, %s21
    %p23 = scmp.eq.s32.totalorder %s22, 0
    %s25 = sadd.s32 %s24, 1
    %s26 = scalar_select %p23, %s24, %s25
    %p29 = pneg %p23
    %p30 = scmp.eq.s32.totalorder %s14, 1
    %p31 = por %p29, %p30
    %p32 = scmp.ne.s32.totalorder %s24, %s27
    %p33 = scmp.eq.s32.totalorder %s14, 0
    %p34 = por %p32, %p33
    %p35 = scmp.ne.s32.totalorder %s24, %s27
    %p36 = scmp.eq.s32.totalorder %s19, 1
    %p37 = por %p35, %p36
    %p38 = scmp.ne.s32.totalorder %s27, %s28
    %p39 = scmp.eq.s32.totalorder %s19, 0
    %p40 = por %p38, %p39
    %p41 = scmp.ne.s32.totalorder %s27, %s28
    %p42 = scmp.eq.s32.totalorder %s20, 1
    %p43 = por %p41, %p42
    %p45 = scmp.ne.s32.totalorder %s28, %s44
    %p46 = scmp.eq.s32.totalorder %s20, 0
    %p47 = por %p45, %p46
    %s49 = sadd.s32 %s48, 1
    %p52 = scmp.eq.s32.totalorder %s14, 1
    %p53 = scmp.ne.s32.totalorder %s48, %s50
    %p54 = scmp.eq.s32.totalorder %s14, 0
    %p55 = por %p53, %p54
    %p56 = scmp.ne.s32.totalorder %s48, %s50
    %p57 = scmp.eq.s32.totalorder %s19, 1
    %p58 = por %p56, %p57
    %p59 = scmp.ne.s32.totalorder %s50, %s51
    %p60 = scmp.eq.s32.totalorder %s19, 0
    %p61 = por %p59, %p60
    %p62 = scmp.ne.s32.totalorder %s50, %s51
    %p63 = scmp.eq.s32.totalorder %s20, 1
    %p64 = por %p62, %p63
    %p66 = scmp.ne.s32.totalorder %s51, %s65
    %p67 = scmp.eq.s32.totalorder %s20, 0
    %p68 = por %p66, %p67
    %s70 = sadd.s32 %s69, 1
    %p73 = scmp.eq.s32.totalorder %s14, 1
    %p74 = scmp.ne.s32.totalorder %s69, %s71
    %p75 = scmp.eq.s32.totalorder %s14, 0
    %p76 = por %p74, %p75
    %p77 = scmp.ne.s32.totalorder %s69, %s71
    %p78 = scmp.eq.s32.totalorder %s19, 1
    %p79 = por %p77, %p78
    %p80 = scmp.ne.s32.totalorder %s71, %s72
    %p81 = scmp.eq.s32.totalorder %s19, 0
    %p82 = por %p80, %p81
    %p83 = scmp.ne.s32.totalorder %s71, %s72
    %p84 = scmp.eq.s32.totalorder %s20, 1
    %p85 = por %p83, %p84
    %p87 = scmp.ne.s32.totalorder %s72, %s86
    %p88 = scmp.eq.s32.totalorder %s20, 0
    %p89 = por %p87, %p88
    %s91 = sadd.s32 %s90, 1
    %p94 = scmp.eq.s32.totalorder %s14, 1
    %p95 = scmp.ne.s32.totalorder %s90, %s92
    %p96 = scmp.eq.s32.totalorder %s14, 0
    %p97 = por %p95, %p96
    %p98 = scmp.ne.s32.totalorder %s90, %s92
    %p99 = scmp.eq.s32.totalorder %s19, 1
    %p100 = por %p98, %p99
    %p101 = scmp.ne.s32.totalorder %s92, %s93
    %p102 = scmp.eq.s32.totalorder %s19, 0
    %p103 = por %p101, %p102
    %p104 = scmp.ne.s32.totalorder %s92, %s93
    %p105 = scmp.eq.s32.totalorder %s20, 1
    %p106 = por %p104, %p105
    %p108 = scmp.ne.s32.totalorder %s93, %s107
    %p109 = scmp.eq.s32.totalorder %s20, 0
    %p110 = por %p108, %p109
    %s112 = sadd.s32 %s111, 1
    %p115 = scmp.eq.s32.totalorder %s14, 1
    %p116 = scmp.ne.s32.totalorder %s111, %s113
    %p117 = scmp.eq.s32.totalorder %s14, 0
    %p118 = por %p116, %p117
    %p119 = scmp.ne.s32.totalorder %s111, %s113
    %p120 = scmp.eq.s32.totalorder %s19, 1
    %p121 = por %p119, %p120
    %p122 = scmp.ne.s32.totalorder %s113, %s114
    %p123 = scmp.eq.s32.totalorder %s19, 0
    %p124 = por %p122, %p123
    %p125 = scmp.ne.s32.totalorder %s113, %s114
    %p126 = scmp.eq.s32.totalorder %s20, 1
    %p127 = por %p125, %p126
    %p129 = scmp.ne.s32.totalorder %s114, %s128
    %p130 = scmp.eq.s32.totalorder %s20, 0
    %p131 = por %p129, %p130
    %s133 = sadd.s32 %s132, 1
    %p136 = scmp.eq.s32.totalorder %s14, 1
    %p137 = scmp.ne.s32.totalorder %s132, %s134
    %p138 = scmp.eq.s32.totalorder %s14, 0
    %p139 = por %p137, %p138
    %p140 = scmp.ne.s32.totalorder %s132, %s134
    %p141 = scmp.eq.s32.totalorder %s19, 1
    %p142 = por %p140, %p141
    %p143 = scmp.ne.s32.totalorder %s134, %s135
    %p144 = scmp.eq.s32.totalorder %s19, 0
    %p145 = por %p143, %p144
    %p146 = scmp.ne.s32.totalorder %s134, %s135
    %p147 = scmp.eq.s32.totalorder %s20, 1
    %p148 = por %p146, %p147
    %p150 = scmp.ne.s32.totalorder %s135, %s149
    %p151 = scmp.eq.s32.totalorder %s20, 0
    %p152 = por %p150, %p151
    %s154 = sadd.s32 %s153, 1
    %p157 = scmp.eq.s32.totalorder %s14, 1
    %p158 = scmp.ne.s32.totalorder %s153, %s155
    %p159 = scmp.eq.s32.totalorder %s14, 0
    %p160 = por %p158, %p159
    %p161 = scmp.ne.s32.totalorder %s153, %s155
    %p162 = scmp.eq.s32.totalorder %s19, 1
    %p163 = por %p161, %p162
    %p164 = scmp.ne.s32.totalorder %s155, %s156
    %p165 = scmp.eq.s32.totalorder %s19, 0
    %p166 = por %p164, %p165
    %p167 = scmp.ne.s32.totalorder %s155, %s156
    %p168 = scmp.eq.s32.totalorder %s20, 1
    %p169 = por %p167, %p168
    %p171 = scmp.ne.s32.totalorder %s156, %s170
    %p172 = scmp.eq.s32.totalorder %s20, 0
    %p173 = por %p171, %p172
    %s174 = ssub.s32 %s14, %s21
    %p175 = scmp.eq.s32.totalorder %s174, 0
    %s177 = sadd.s32 %s176, 1
    %s178 = scalar_select %p175, %s176, %s177
    %p181 = pneg %p175
    %p182 = scmp.eq.s32.totalorder %s14, 1
    %p183 = por %p181, %p182
    %p184 = scmp.ne.s32.totalorder %s176, %s179
    %p185 = scmp.eq.s32.totalorder %s14, 0
    %p186 = por %p184, %p185
    %p187 = scmp.ne.s32.totalorder %s176, %s179
    %p188 = scmp.eq.s32.totalorder %s19, 1
    %p189 = por %p187, %p188
    %p190 = scmp.ne.s32.totalorder %s179, %s180
    %p191 = scmp.eq.s32.totalorder %s19, 0
    %p192 = por %p190, %p191
    %p193 = scmp.ne.s32.totalorder %s179, %s180
    %p194 = scmp.eq.s32.totalorder %s20, 1
    %p195 = por %p193, %p194
    %p197 = scmp.ne.s32.totalorder %s180, %s196
    %p198 = scmp.eq.s32.totalorder %s20, 0
    %p199 = por %p197, %p198
    %p200 = scmp.le.s32.totalorder 1, %s14
    %p201 = scmp.lt.s32.totalorder %s14, 3
    %p202 = pnand %p200, %p201
    %p203 = pneg %p202
    // Predicated region
    $region9: #{cbam_pallas.1} parent=5 // pred_check
      _
    $region10: #{cbam_pallas.1} parent=5 // pred_check_branch
      %205 = sbr.rel (%p202) target = $region12
    $region11: #{cbam_pallas.1} parent=5 // pred_region
      %s206 = ssub.s32 %s14, 1
      // Predicated region
      $region13: #{cbam_pallas.1} parent=11 // pred_check
        %p207 = pneg %p61
      $region14: #{cbam_pallas.1} parent=11 // pred_check_branch
        %209 = sbr.rel (%p207) target = $region16
      $region15: #{cbam_pallas.1} parent=11 // pred_region
        _
      $region16: #{cbam_pallas.1} parent=11 // pred_fallthru
        _
      // Predicated region
      $region17: #{cbam_pallas.1} parent=11 // pred_check
        %p210 = pneg %p82
      $region18: #{cbam_pallas.1} parent=11 // pred_check_branch
        %212 = sbr.rel (%p210) target = $region20
      $region19: #{cbam_pallas.1} parent=11 // pred_region
        _
      $region20: #{cbam_pallas.1} parent=11 // pred_fallthru
        _
      // Predicated region
      $region21: #{cbam_pallas.1} parent=11 // pred_check
        %p213 = pneg %p103
      $region22: #{cbam_pallas.1} parent=11 // pred_check_branch
        %215 = sbr.rel (%p213) target = $region24
      $region23: #{cbam_pallas.1} parent=11 // pred_region
        _
      $region24: #{cbam_pallas.1} parent=11 // pred_fallthru
        _
      // Predicated region
      $region25: #{cbam_pallas.1} parent=11 // pred_check
        %p216 = pneg %p124
      $region26: #{cbam_pallas.1} parent=11 // pred_check_branch
        %218 = sbr.rel (%p216) target = $region28
      $region27: #{cbam_pallas.1} parent=11 // pred_region
        _
      $region28: #{cbam_pallas.1} parent=11 // pred_fallthru
        _
      // Predicated region
      $region29: #{cbam_pallas.1} parent=11 // pred_check
        %p219 = pneg %p145
      $region30: #{cbam_pallas.1} parent=11 // pred_check_branch
        %221 = sbr.rel (%p219) target = $region32
      $region31: #{cbam_pallas.1} parent=11 // pred_region
        _
      $region32: #{cbam_pallas.1} parent=11 // pred_fallthru
        _
      // Predicated region
      $region33: #{cbam_pallas.1} parent=11 // pred_check
        %p222 = pneg %p166
      $region34: #{cbam_pallas.1} parent=11 // pred_check_branch
        %224 = sbr.rel (%p222) target = $region36
      $region35: #{cbam_pallas.1} parent=11 // pred_region
        _
      $region36: #{cbam_pallas.1} parent=11 // pred_fallthru
        _
    $region12: #{cbam_pallas.1} parent=5 // pred_fallthru
      _
    %p225 = scmp.lt.s32.totalorder %s14, 2
    // Predicated region
    $region37: #{cbam_pallas.1} parent=5 // pred_check
      %p226 = pneg %p225
    $region38: #{cbam_pallas.1} parent=5 // pred_check_branch
      %228 = sbr.rel (%p226) target = $region40
    $region39: #{cbam_pallas.1} parent=5 // pred_region
      // Predicated region
      $region41: #{cbam_pallas.1} parent=39 // pred_check
        %p229 = pneg %p34
      $region42: #{cbam_pallas.1} parent=39 // pred_check_branch
        %231 = sbr.rel (%p229) target = $region44
      $region43: #{cbam_pallas.1} parent=39 // pred_region
        %p232 = scmp.lt.s32.totalorder %s14, 1
        %s233 = scalar_select %p232, %s14, 1
        %s234 = smul.addr %s233, 8
        %s235 = smul.addr %s234, 8
        %s236 = scalar_lea.vmem %s0, %s235
      $region44: #{cbam_pallas.1} parent=39 // pred_fallthru
        _
    $region40: #{cbam_pallas.1} parent=5 // pred_fallthru
      _
    %p237 = scmp.le.s32.totalorder 1, %s14
    %p238 = scmp.lt.s32.totalorder %s14, 3
    %p239 = pnand %p237, %p238
    %p240 = pneg %p239
    // Predicated region
    $region45: #{cbam_pallas.1} parent=5 // pred_check
      _
    $region46: #{cbam_pallas.1} parent=5 // pred_check_branch
      %242 = sbr.rel (%p239) target = $region48
    $region47: #{cbam_pallas.1} parent=5 // pred_region
      %s243 = ssub.s32 %s14, 1
      %p244 = scmp.lt.s32.totalorder %s19, 1
      %s245 = scalar_select %p244, %s19, 1
      %s246 = smul.addr %s245, 8
      %s247 = smul.addr %s246, 8
      %s248 = scalar_lea.vmem %s0, %s247
      %p249 = pneg %p40
      %p250 = pneg %p37
      %p251 = pneg %p61
      %p252 = pneg %p58
      %p253 = pneg %p82
      %p254 = pneg %p79
      %p255 = pneg %p103
      %p256 = pneg %p100
      %p257 = pneg %p124
      %p258 = pneg %p121
      %p259 = pneg %p145
      %p260 = pneg %p142
      %p261 = pneg %p166
      %p262 = pneg %p163
      %p263 = pneg %p192
      %p264 = pneg %p189
      %p265 = scmp.lt.s32.totalorder %s19, 1
      %s266 = scalar_select %p265, %s19, 1
      %s267 = smul.addr %s266, 8
      %s268 = smul.addr %s267, 8
      %s269 = scalar_lea.vmem %s7, %s268
      %p270 = scmp.lt.s32.totalorder %s19, 1
      %s271 = scalar_select %p270, %s19, 1
      %s272 = smul.addr %s271, 8
      %s273 = smul.addr %s272, 8
      %s274 = scalar_lea.vmem %s0, %s273
      %p275 = scmp.lt.s32.totalorder %s19, 1
      %s276 = scalar_select %p275, %s19, 1
      %s277 = smul.addr %s276, 8
      %s278 = smul.addr %s277, 8
      %s279 = scalar_lea.vmem %s7, %s278
      %v280 = vld [vmem:[%s274] sm:$0xff]
      %v281 = vld [vmem:[%s274 + $0x8] sm:$0xff]
      %v282 = vld [vmem:[%s274 + $0x10] sm:$0xff]
      %v283 = vld [vmem:[%s274 + $0x18] sm:$0xff]
      %v284 = vld [vmem:[%s274 + $0x20] sm:$0xff]
      %v285 = vld [vmem:[%s274 + $0x28] sm:$0xff]
      %v286 = vld [vmem:[%s274 + $0x30] sm:$0xff]
      %v287 = vld [vmem:[%s274 + $0x38] sm:$0xff]
      %v288 = vadd.f32 %v280, %v281
      %289 = vadd.xlane.f32.xlu0 %v288
      %v290 = vpop.xlane.xlu0 %289
      %v291 = vadd.f32 %v282, %v283
      %292 = vadd.xlane.f32.xlu0 %v291
      %v293 = vpop.xlane.xlu0 %292
      %v294 = vadd.f32 %v284, %v285
      %295 = vadd.xlane.f32.xlu0 %v294
      %v296 = vpop.xlane.xlu0 %295
      %v297 = vadd.f32 %v286, %v287
      %298 = vadd.xlane.f32.xlu0 %v297
      %v299 = vpop.xlane.xlu0 %298
      %v300 = vrcp.pop 256.0
      %v301 = vmul.f32 %v290, %v300
      %v302 = vmul.f32 %v293, %v300
      %v303 = vmul.f32 %v296, %v300
      %v304 = vmul.f32 %v299, %v300
      %v305 = vmax.f32 %v280, %v281
      %306 = vmax.xlane.f32.xlu0 %v305
      %v307 = vpop.xlane.xlu0 %306
      %v308 = vmax.f32 %v282, %v283
      %309 = vmax.xlane.f32.xlu0 %v308
      %v310 = vpop.xlane.xlu0 %309
      %v311 = vmax.f32 %v284, %v285
      %312 = vmax.xlane.f32.xlu0 %v311
      %v313 = vpop.xlane.xlu0 %312
      %v314 = vmax.f32 %v286, %v287
      %315 = vmax.xlane.f32.xlu0 %v314
      %v316 = vpop.xlane.xlu0 %315
      %v317 = vld [vmem:[%s1] sm:$0xff]
      %v318 = vld [vmem:[%s1 + $0x8] sm:$0xff]
      %v319 = vld [vmem:[%s1 + $0x10] sm:$0xff]
      %v320 = vld [vmem:[%s1 + $0x18] sm:$0xff]
      %v321 = vld [vmem:[%s2] sm:$0xff]
      %v322 = vld [vmem:[%s2 + $0x8] sm:$0xff]
      %v323 = vld [vmem:[%s2 + $0x10] sm:$0xff]
      %v324 = vld [vmem:[%s2 + $0x18] sm:$0xff]
      %v325 = vmul.f32 %v317, %v301
      %v326 = vmul.f32 %v318, %v302
      %v327 = vmul.f32 %v319, %v303
      %v328 = vmul.f32 %v320, %v304
      %vm329 = vcmask 15360
      %v330 = vsel %vm329, %v325, 0.0
      %v331 = vsel %vm329, %v326, 0.0
      %v332 = vadd.f32 %v330, %v331
      %v333 = vsel %vm329, %v327, 0.0
      %v334 = vadd.f32 %v332, %v333
      %v335 = vsel %vm329, %v328, 0.0
      %v336 = vadd.f32 %v334, %v335
      %v337 = vrot.slane %v336, 4
      %v338 = vadd.f32 %v336, %v337
      %v339 = vrot.slane %v338, 2
      %v340 = vadd.f32 %v338, %v339
      %v341 = vrot.slane %v340, 1
      %v342 = vadd.f32 %v340, %v341
      %v343 = vmax.f32 %v342, 0.0
      %v344 = vmul.f32 %v321, %v343
      %v345 = vmul.f32 %v322, %v343
      %v346 = vmul.f32 %v323, %v343
      %v347 = vmul.f32 %v324, %v343
      %v348 = vsel %vm329, %v344, 0.0
      %349 = vadd.xlane.f32.xlu0 %v348
      %v350 = vpop.xlane.xlu0 %349
      %v351 = vsel %vm329, %v345, 0.0
      %352 = vadd.xlane.f32.xlu0 %v351
      %v353 = vpop.xlane.xlu0 %352
      %v354 = vsel %vm329, %v346, 0.0
      %355 = vadd.xlane.f32.xlu0 %v354
      %v356 = vpop.xlane.xlu0 %355
      %v357 = vsel %vm329, %v347, 0.0
      %358 = vadd.xlane.f32.xlu0 %v357
      %v359 = vpop.xlane.xlu0 %358
      %v360 = vmul.f32 %v317, %v307
      %v361 = vmul.f32 %v318, %v310
      %v362 = vmul.f32 %v319, %v313
      %v363 = vmul.f32 %v320, %v316
      %v364 = vsel %vm329, %v360, 0.0
      %v365 = vsel %vm329, %v361, 0.0
      %v366 = vadd.f32 %v364, %v365
      %v367 = vsel %vm329, %v362, 0.0
      %v368 = vadd.f32 %v366, %v367
      %v369 = vsel %vm329, %v363, 0.0
      %v370 = vadd.f32 %v368, %v369
      %v371 = vrot.slane %v370, 4
      %v372 = vadd.f32 %v370, %v371
      %v373 = vrot.slane %v372, 2
      %v374 = vadd.f32 %v372, %v373
      %v375 = vrot.slane %v374, 1
      %v376 = vadd.f32 %v374, %v375
      %v377 = vmax.f32 %v376, 0.0
      %v378 = vmul.f32 %v321, %v377
      %v379 = vmul.f32 %v322, %v377
      %v380 = vmul.f32 %v323, %v377
      %v381 = vmul.f32 %v324, %v377
      %v382 = vsel %vm329, %v378, 0.0
      %383 = vadd.xlane.f32.xlu0 %v382
      %v384 = vpop.xlane.xlu0 %383
      %v385 = vsel %vm329, %v379, 0.0
      %386 = vadd.xlane.f32.xlu0 %v385
      %v387 = vpop.xlane.xlu0 %386
      %v388 = vsel %vm329, %v380, 0.0
      %389 = vadd.xlane.f32.xlu0 %v388
      %v390 = vpop.xlane.xlu0 %389
      %v391 = vsel %vm329, %v381, 0.0
      %392 = vadd.xlane.f32.xlu0 %v391
      %v393 = vpop.xlane.xlu0 %392
      %v394 = vadd.f32 %v350, %v384
      %v395 = vadd.f32 %v353, %v387
      %v396 = vadd.f32 %v356, %v390
      %v397 = vadd.f32 %v359, %v393
      %v398 = vxor.u32 %v394, 2147483648
      %v399 = vxor.u32 %v395, 2147483648
      %v400 = vxor.u32 %v396, 2147483648
      %v401 = vxor.u32 %v397, 2147483648
      %v402 = vmul.f32 %v398, 1.442695
      %v403 = vpow.pop %v402
      %v404 = vmul.f32 %v399, 1.442695
      %v405 = vpow.pop %v404
      %v406 = vmul.f32 %v400, 1.442695
      %v407 = vpow.pop %v406
      %v408 = vmul.f32 %v401, 1.442695
      %v409 = vpow.pop %v408
      %v410 = vadd.f32 %v403, 1.0
      %v411 = vadd.f32 %v405, 1.0
      %v412 = vadd.f32 %v407, 1.0
      %v413 = vadd.f32 %v409, 1.0
      %v414 = vrcp.pop %v410
      %v415 = vmul.f32 1.0, %v414
      %v416 = vrcp.pop %v411
      %v417 = vmul.f32 1.0, %v416
      %v418 = vrcp.pop %v412
      %v419 = vmul.f32 1.0, %v418
      %v420 = vrcp.pop %v413
      %v421 = vmul.f32 1.0, %v420
      %v422 = vmul.f32 %v280, %v415
      %v423 = vmul.f32 %v281, %v415
      %v424 = vmul.f32 %v282, %v417
      %v425 = vmul.f32 %v283, %v417
      %v426 = vmul.f32 %v284, %v419
      %v427 = vmul.f32 %v285, %v419
      %v428 = vmul.f32 %v286, %v421
      %v429 = vmul.f32 %v287, %v421
      %v430 = vadd.f32 %v422, %v424
      %v431 = vadd.f32 %v430, %v426
      %v432 = vadd.f32 %v431, %v428
      %v433 = vrot.slane %v432, 4
      %v434 = vadd.f32 %v432, %v433
      %v435 = vrot.slane %v434, 2
      %v436 = vadd.f32 %v434, %v435
      %v437 = vrot.slane %v436, 1
      %v438 = vadd.f32 %v436, %v437
      %v439 = vadd.f32 %v423, %v425
      %v440 = vadd.f32 %v439, %v427
      %v441 = vadd.f32 %v440, %v429
      %v442 = vrot.slane %v441, 4
      %v443 = vadd.f32 %v441, %v442
      %v444 = vrot.slane %v443, 2
      %v445 = vadd.f32 %v443, %v444
      %v446 = vrot.slane %v445, 1
      %v447 = vadd.f32 %v445, %v446
      %v448 = vrcp.pop 32.0
      %v449 = vmul.f32 %v438, %v448
      %v450 = vmul.f32 %v447, %v448
      %v451 = vmax.f32 %v422, %v426
      %v452 = vmax.f32 %v424, %v428
      %v453 = vmax.f32 %v451, %v452
      %v454 = vrot.slane %v453, 4
      %v455 = vmax.f32 %v453, %v454
      %v456 = vrot.slane %v455, 2
      %v457 = vmax.f32 %v455, %v456
      %v458 = vrot.slane %v457, 1
      %v459 = vmax.f32 %v457, %v458
      %v460 = vmax.f32 %v423, %v427
      %v461 = vmax.f32 %v425, %v429
      %v462 = vmax.f32 %v460, %v461
      %v463 = vrot.slane %v462, 4
      %v464 = vmax.f32 %v462, %v463
      %v465 = vrot.slane %v464, 2
      %v466 = vmax.f32 %v464, %v465
      %v467 = vrot.slane %v466, 1
      %v468 = vmax.f32 %v466, %v467
      %vm469 = vcmask 1040384
      %v470 = vsel %vm469, %v449, %v459
      %v471 = vsel %vm469, %v450, %v468
      %472 = vrot.lane.b32.xlu0 %v470, 3
      %v473 = vpop.permute.xlu0 %472
      %474 = vrot.lane.b32.xlu0 %v471, 3
      %v475 = vpop.permute.xlu0 %474
      %v476 = vlaneseq
      %v477 = vand.u32 %v476, 127
      %vm478 = vcmp.lt.s32.totalorder %v477, 3
      %v479 = vsel %vm478, %v473, %v475
      %v480 = vsel %vm478, %v475, %v473
      %v481 = vld [vmem:[%s5] ss:$8 sm:$0x3]
      %v483 = vlaneseq
      %v484 = vshrl.u32 %v483, 7
      %v485 = vsub.s32 0, %v484
      %v486 = vrot.slane %v481, %v485
      %v487 = vlaneseq
      %v488 = vshrl.u32 %v487, 7
      %v489 = vsub.s32 1, %v488
      %v490 = vrot.slane %v481, %v489
      %v493 = vmul.f32 %v480, %v486
      %v494 = vmul.f32 %v479, %v490
      %495 = vrot.lane.b32.xlu0 %v470, 2
      %v496 = vpop.permute.xlu0 %495
      %497 = vrot.lane.b32.xlu0 %v471, 2
      %v498 = vpop.permute.xlu0 %497
      %vm499 = vcmp.lt.s32.totalorder %v477, 2
      %v500 = vsel %vm499, %v496, %v498
      %v501 = vsel %vm499, %v498, %v496
      %s502 = scalar_lea.vmem %s5, 1
      %v503 = vld [vmem:[%s502] ss:$8 sm:$0x3]
      %v505 = vlaneseq
      %v506 = vshrl.u32 %v505, 7
      %v507 = vsub.s32 0, %v506
      %v508 = vrot.slane %v503, %v507
      %v509 = vlaneseq
      %v510 = vshrl.u32 %v509, 7
      %v511 = vsub.s32 1, %v510
      %v512 = vrot.slane %v503, %v511
      %v515 = vmul.f32 %v501, %v508
      %v516 = vmul.f32 %v500, %v512
      %517 = vrot.lane.b32.xlu0 %v470, 1
      %v518 = vpop.permute.xlu0 %517
      %519 = vrot.lane.b32.xlu0 %v471, 1
      %v520 = vpop.permute.xlu0 %519
      %vm521 = vcmp.lt.s32.totalorder %v477, 1
      %v522 = vsel %vm521, %v518, %v520
      %v523 = vsel %vm521, %v520, %v518
      %s524 = scalar_lea.vmem %s5, 2
      %v525 = vld [vmem:[%s524] ss:$8 sm:$0x3]
      %v527 = vlaneseq
      %v528 = vshrl.u32 %v527, 7
      %v529 = vsub.s32 0, %v528
      %v530 = vrot.slane %v525, %v529
      %v531 = vlaneseq
      %v532 = vshrl.u32 %v531, 7
      %v533 = vsub.s32 1, %v532
      %v534 = vrot.slane %v525, %v533
      %v537 = vmul.f32 %v523, %v530
      %v538 = vmul.f32 %v522, %v534
      %539 = vrot.lane.b32.xlu0 %v470, 127
      %v540 = vpop.permute.xlu0 %539
      %541 = vrot.lane.b32.xlu0 %v471, 127
      %v542 = vpop.permute.xlu0 %541
      %vm543 = vcmp.lt.s32.totalorder %v477, 127
      %v544 = vsel %vm543, %v540, %v542
      %v545 = vsel %vm543, %v542, %v540
      %s546 = scalar_lea.vmem %s5, 4
      %v547 = vld [vmem:[%s546] ss:$8 sm:$0x3]
      %v549 = vlaneseq
      %v550 = vshrl.u32 %v549, 7
      %v551 = vsub.s32 0, %v550
      %v552 = vrot.slane %v547, %v551
      %v553 = vlaneseq
      %v554 = vshrl.u32 %v553, 7
      %v555 = vsub.s32 1, %v554
      %v556 = vrot.slane %v547, %v555
      %v559 = vmul.f32 %v544, %v552
      %v560 = vmul.f32 %v545, %v556
      %561 = vrot.lane.b32.xlu0 %v470, 126
      %v562 = vpop.permute.xlu0 %561
      %563 = vrot.lane.b32.xlu0 %v471, 126
      %v564 = vpop.permute.xlu0 %563
      %vm565 = vcmp.lt.s32.totalorder %v477, 126
      %v566 = vsel %vm565, %v562, %v564
      %v567 = vsel %vm565, %v564, %v562
      %s568 = scalar_lea.vmem %s5, 5
      %v569 = vld [vmem:[%s568] ss:$8 sm:$0x3]
      %v571 = vlaneseq
      %v572 = vshrl.u32 %v571, 7
      %v573 = vsub.s32 0, %v572
      %v574 = vrot.slane %v569, %v573
      %v575 = vlaneseq
      %v576 = vshrl.u32 %v575, 7
      %v577 = vsub.s32 1, %v576
      %v578 = vrot.slane %v569, %v577
      %v581 = vmul.f32 %v566, %v574
      %v582 = vmul.f32 %v567, %v578
      %583 = vrot.lane.b32.xlu0 %v470, 125
      %v584 = vpop.permute.xlu0 %583
      %585 = vrot.lane.b32.xlu0 %v471, 125
      %v586 = vpop.permute.xlu0 %585
      %vm587 = vcmp.lt.s32.totalorder %v477, 125
      %v588 = vsel %vm587, %v584, %v586
      %v589 = vsel %vm587, %v586, %v584
      %s590 = scalar_lea.vmem %s5, 6
      %v591 = vld [vmem:[%s590] ss:$8 sm:$0x3]
      %v593 = vlaneseq
      %v594 = vshrl.u32 %v593, 7
      %v595 = vsub.s32 0, %v594
      %v596 = vrot.slane %v591, %v595
      %v597 = vlaneseq
      %v598 = vshrl.u32 %v597, 7
      %v599 = vsub.s32 1, %v598
      %v600 = vrot.slane %v591, %v599
      %v603 = vmul.f32 %v588, %v596
      %v604 = vmul.f32 %v589, %v600
      %605 = vrot.lane.b32.xlu0 %v493, 48
      %v606 = vpop.permute.xlu0 %605
      %607 = vrot.lane.b32.xlu0 %v494, 48
      %v608 = vpop.permute.xlu0 %607
      %vm609 = vcmp.lt.s32.totalorder %v477, 48
      %v610 = vsel %vm609, %v606, %v608
      %v611 = vsel %vm609, %v608, %v606
      %v612 = vld [vmem:[%s3] sm:$0x3]
      %614 = vset.pattern.permute.xlu0 0
      %615 = vperm.xlu0 %614, %v612
      %v616 = vpop.permute.xlu0 %615
      %v618 = vmul.f32 %v616, %v611
      %v619 = vmul.f32 %v616, %v610
      %v620 = vadd.f32 %v618, 0.0
      %v621 = vadd.f32 %v619, 0.0
      %622 = vrot.lane.b32.xlu0 %v515, 48
      %v623 = vpop.permute.xlu0 %622
      %624 = vrot.lane.b32.xlu0 %v516, 48
      %v625 = vpop.permute.xlu0 %624
      %v626 = vsel %vm609, %v623, %v625
      %v627 = vsel %vm609, %v625, %v623
      %s628 = scalar_lea.vmem %s3, 2
      %v629 = vld [vmem:[%s628] sm:$0x3]
      %631 = vset.pattern.permute.xlu0 0
      %632 = vperm.xlu0 %631, %v629
      %v633 = vpop.permute.xlu0 %632
      %v635 = vmul.f32 %v633, %v627
      %v636 = vmul.f32 %v633, %v626
      %v637 = vadd.f32 %v620, %v635
      %v638 = vadd.f32 %v621, %v636
      %639 = vrot.lane.b32.xlu0 %v537, 48
      %v640 = vpop.permute.xlu0 %639
      %641 = vrot.lane.b32.xlu0 %v538, 48
      %v642 = vpop.permute.xlu0 %641
      %v643 = vsel %vm609, %v640, %v642
      %v644 = vsel %vm609, %v642, %v640
      %s645 = scalar_lea.vmem %s3, 4
      %v646 = vld [vmem:[%s645] sm:$0x3]
      %648 = vset.pattern.permute.xlu0 0
      %649 = vperm.xlu0 %648, %v646
      %v650 = vpop.permute.xlu0 %649
      %v652 = vmul.f32 %v650, %v644
      %v653 = vmul.f32 %v650, %v643
      %v654 = vadd.f32 %v637, %v652
      %v655 = vadd.f32 %v638, %v653
      %656 = vrot.lane.b32.xlu0 %v470, 48
      %v657 = vpop.permute.xlu0 %656
      %658 = vrot.lane.b32.xlu0 %v471, 48
      %v659 = vpop.permute.xlu0 %658
      %v660 = vsel %vm609, %v657, %v659
      %v661 = vsel %vm609, %v659, %v657
      %s662 = scalar_lea.vmem %s3, 6
      %v663 = vld [vmem:[%s662] sm:$0x3]
      %665 = vset.pattern.permute.xlu0 0
      %666 = vperm.xlu0 %665, %v663
      %v667 = vpop.permute.xlu0 %666
      %v669 = vmul.f32 %v667, %v661
      %v670 = vmul.f32 %v667, %v660
      %v671 = vadd.f32 %v654, %v669
      %v672 = vadd.f32 %v655, %v670
      %673 = vrot.lane.b32.xlu0 %v559, 48
      %v674 = vpop.permute.xlu0 %673
      %675 = vrot.lane.b32.xlu0 %v560, 48
      %v676 = vpop.permute.xlu0 %675
      %v677 = vsel %vm609, %v674, %v676
      %v678 = vsel %vm609, %v676, %v674
      %s679 = scalar_lea.vmem %s3, 8
      %v680 = vld [vmem:[%s679] sm:$0x3]
      %682 = vset.pattern.permute.xlu0 0
      %683 = vperm.xlu0 %682, %v680
      %v684 = vpop.permute.xlu0 %683
      %v686 = vmul.f32 %v684, %v678
      %v687 = vmul.f32 %v684, %v677
      %v688 = vadd.f32 %v671, %v686
      %v689 = vadd.f32 %v672, %v687
      %690 = vrot.lane.b32.xlu0 %v581, 48
      %v691 = vpop.permute.xlu0 %690
      %692 = vrot.lane.b32.xlu0 %v582, 48
      %v693 = vpop.permute.xlu0 %692
      %v694 = vsel %vm609, %v691, %v693
      %v695 = vsel %vm609, %v693, %v691
      %s696 = scalar_lea.vmem %s3, 10
      %v697 = vld [vmem:[%s696] sm:$0x3]
      %699 = vset.pattern.permute.xlu0 0
      %700 = vperm.xlu0 %699, %v697
      %v701 = vpop.permute.xlu0 %700
      %v703 = vmul.f32 %v701, %v695
      %v704 = vmul.f32 %v701, %v694
      %v705 = vadd.f32 %v688, %v703
      %v706 = vadd.f32 %v689, %v704
      %707 = vrot.lane.b32.xlu0 %v603, 48
      %v708 = vpop.permute.xlu0 %707
      %709 = vrot.lane.b32.xlu0 %v604, 48
      %v710 = vpop.permute.xlu0 %709
      %v711 = vsel %vm609, %v708, %v710
      %v712 = vsel %vm609, %v710, %v708
      %s713 = scalar_lea.vmem %s3, 12
      %v714 = vld [vmem:[%s713] sm:$0x3]
      %716 = vset.pattern.permute.xlu0 0
      %717 = vperm.xlu0 %716, %v714
      %v718 = vpop.permute.xlu0 %717
      %v720 = vmul.f32 %v718, %v712
      %v721 = vmul.f32 %v718, %v711
      %v722 = vadd.f32 %v705, %v720
      %v723 = vadd.f32 %v706, %v721
      %v724 = vld [vmem:[%s4] ss:$8 sm:$0x3]
      %v726 = vlaneseq
      %v727 = vshrl.u32 %v726, 7
      %v728 = vsub.s32 0, %v727
      %v729 = vrot.slane %v724, %v728
      %v730 = vlaneseq
      %v731 = vshrl.u32 %v730, 7
      %v732 = vsub.s32 1, %v731
      %v733 = vrot.slane %v724, %v732
      %v736 = vmul.f32 %v722, %v729
      %v737 = vmul.f32 %v723, %v733
      %v738 = vadd.f32 %v736, 0.0
      %v739 = vadd.f32 %v737, 0.0
      %740 = vrot.lane.b32.xlu0 %v493, 32
      %v741 = vpop.permute.xlu0 %740
      %742 = vrot.lane.b32.xlu0 %v494, 32
      %v743 = vpop.permute.xlu0 %742
      %vm744 = vcmp.lt.s32.totalorder %v477, 32
      %v745 = vsel %vm744, %v741, %v743
      %v746 = vsel %vm744, %v743, %v741
      %s747 = scalar_lea.vmem %s3, 14
      %v748 = vld [vmem:[%s747] sm:$0x3]
      %750 = vset.pattern.permute.xlu0 0
      %751 = vperm.xlu0 %750, %v748
      %v752 = vpop.permute.xlu0 %751
      %v754 = vmul.f32 %v752, %v746
      %v755 = vmul.f32 %v752, %v745
      %v756 = vadd.f32 %v754, 0.0
      %v757 = vadd.f32 %v755, 0.0
      %758 = vrot.lane.b32.xlu0 %v515, 32
      %v759 = vpop.permute.xlu0 %758
      %760 = vrot.lane.b32.xlu0 %v516, 32
      %v761 = vpop.permute.xlu0 %760
      %v762 = vsel %vm744, %v759, %v761
      %v763 = vsel %vm744, %v761, %v759
      %s764 = scalar_lea.vmem %s3, 16
      %v765 = vld [vmem:[%s764] sm:$0x3]
      %767 = vset.pattern.permute.xlu0 0
      %768 = vperm.xlu0 %767, %v765
      %v769 = vpop.permute.xlu0 %768
      %v771 = vmul.f32 %v769, %v763
      %v772 = vmul.f32 %v769, %v762
      %v773 = vadd.f32 %v756, %v771
      %v774 = vadd.f32 %v757, %v772
      %775 = vrot.lane.b32.xlu0 %v537, 32
      %v776 = vpop.permute.xlu0 %775
      %777 = vrot.lane.b32.xlu0 %v538, 32
      %v778 = vpop.permute.xlu0 %777
      %v779 = vsel %vm744, %v776, %v778
      %v780 = vsel %vm744, %v778, %v776
      %s781 = scalar_lea.vmem %s3, 18
      %v782 = vld [vmem:[%s781] sm:$0x3]
      %784 = vset.pattern.permute.xlu0 0
      %785 = vperm.xlu0 %784, %v782
      %v786 = vpop.permute.xlu0 %785
      %v788 = vmul.f32 %v786, %v780
      %v789 = vmul.f32 %v786, %v779
      %v790 = vadd.f32 %v773, %v788
      %v791 = vadd.f32 %v774, %v789
      %792 = vrot.lane.b32.xlu0 %v470, 32
      %v793 = vpop.permute.xlu0 %792
      %794 = vrot.lane.b32.xlu0 %v471, 32
      %v795 = vpop.permute.xlu0 %794
      %v796 = vsel %vm744, %v793, %v795
      %v797 = vsel %vm744, %v795, %v793
      %s798 = scalar_lea.vmem %s3, 20
      %v799 = vld [vmem:[%s798] sm:$0x3]
      %801 = vset.pattern.permute.xlu0 0
      %802 = vperm.xlu0 %801, %v799
      %v803 = vpop.permute.xlu0 %802
      %v805 = vmul.f32 %v803, %v797
      %v806 = vmul.f32 %v803, %v796
      %v807 = vadd.f32 %v790, %v805
      %v808 = vadd.f32 %v791, %v806
      %809 = vrot.lane.b32.xlu0 %v559, 32
      %v810 = vpop.permute.xlu0 %809
      %811 = vrot.lane.b32.xlu0 %v560, 32
      %v812 = vpop.permute.xlu0 %811
      %v813 = vsel %vm744, %v810, %v812
      %v814 = vsel %vm744, %v812, %v810
      %s815 = scalar_lea.vmem %s3, 22
      %v816 = vld [vmem:[%s815] sm:$0x3]
      %818 = vset.pattern.permute.xlu0 0
      %819 = vperm.xlu0 %818, %v816
      %v820 = vpop.permute.xlu0 %819
      %v822 = vmul.f32 %v820, %v814
      %v823 = vmul.f32 %v820, %v813
      %v824 = vadd.f32 %v807, %v822
      %v825 = vadd.f32 %v808, %v823
      %826 = vrot.lane.b32.xlu0 %v581, 32
      %v827 = vpop.permute.xlu0 %826
      %828 = vrot.lane.b32.xlu0 %v582, 32
      %v829 = vpop.permute.xlu0 %828
      %v830 = vsel %vm744, %v827, %v829
      %v831 = vsel %vm744, %v829, %v827
      %s832 = scalar_lea.vmem %s3, 24
      %v833 = vld [vmem:[%s832] sm:$0x3]
      %835 = vset.pattern.permute.xlu0 0
      %836 = vperm.xlu0 %835, %v833
      %v837 = vpop.permute.xlu0 %836
      %v839 = vmul.f32 %v837, %v831
      %v840 = vmul.f32 %v837, %v830
      %v841 = vadd.f32 %v824, %v839
      %v842 = vadd.f32 %v825, %v840
      %843 = vrot.lane.b32.xlu0 %v603, 32
      %v844 = vpop.permute.xlu0 %843
      %845 = vrot.lane.b32.xlu0 %v604, 32
      %v846 = vpop.permute.xlu0 %845
      %v847 = vsel %vm744, %v844, %v846
      %v848 = vsel %vm744, %v846, %v844
      %s849 = scalar_lea.vmem %s3, 26
      %v850 = vld [vmem:[%s849] sm:$0x3]
      %852 = vset.pattern.permute.xlu0 0
      %853 = vperm.xlu0 %852, %v850
      %v854 = vpop.permute.xlu0 %853
      %v856 = vmul.f32 %v854, %v848
      %v857 = vmul.f32 %v854, %v847
      %v858 = vadd.f32 %v841, %v856
      %v859 = vadd.f32 %v842, %v857
      %s860 = scalar_lea.vmem %s4, 1
      %v861 = vld [vmem:[%s860] ss:$8 sm:$0x3]
      %v863 = vlaneseq
      %v864 = vshrl.u32 %v863, 7
      %v865 = vsub.s32 0, %v864
      %v866 = vrot.slane %v861, %v865
      %v867 = vlaneseq
      %v868 = vshrl.u32 %v867, 7
      %v869 = vsub.s32 1, %v868
      %v870 = vrot.slane %v861, %v869
      %v873 = vmul.f32 %v858, %v866
      %v874 = vmul.f32 %v859, %v870
      %v875 = vadd.f32 %v738, %v873
      %v876 = vadd.f32 %v739, %v874
      %877 = vrot.lane.b32.xlu0 %v493, 16
      %v878 = vpop.permute.xlu0 %877
      %879 = vrot.lane.b32.xlu0 %v494, 16
      %v880 = vpop.permute.xlu0 %879
      %vm881 = vcmp.lt.s32.totalorder %v477, 16
      %v882 = vsel %vm881, %v878, %v880
      %v883 = vsel %vm881, %v880, %v878
      %s884 = scalar_lea.vmem %s3, 28
      %v885 = vld [vmem:[%s884] sm:$0x3]
      %887 = vset.pattern.permute.xlu0 0
      %888 = vperm.xlu0 %887, %v885
      %v889 = vpop.permute.xlu0 %888
      %v891 = vmul.f32 %v889, %v883
      %v892 = vmul.f32 %v889, %v882
      %v893 = vadd.f32 %v891, 0.0
      %v894 = vadd.f32 %v892, 0.0
      %895 = vrot.lane.b32.xlu0 %v515, 16
      %v896 = vpop.permute.xlu0 %895
      %897 = vrot.lane.b32.xlu0 %v516, 16
      %v898 = vpop.permute.xlu0 %897
      %v899 = vsel %vm881, %v896, %v898
      %v900 = vsel %vm881, %v898, %v896
      %s901 = scalar_lea.vmem %s3, 30
      %v902 = vld [vmem:[%s901] sm:$0x3]
      %904 = vset.pattern.permute.xlu0 0
      %905 = vperm.xlu0 %904, %v902
      %v906 = vpop.permute.xlu0 %905
      %v908 = vmul.f32 %v906, %v900
      %v909 = vmul.f32 %v906, %v899
      %v910 = vadd.f32 %v893, %v908
      %v911 = vadd.f32 %v894, %v909
      %912 = vrot.lane.b32.xlu0 %v537, 16
      %v913 = vpop.permute.xlu0 %912
      %914 = vrot.lane.b32.xlu0 %v538, 16
      %v915 = vpop.permute.xlu0 %914
      %v916 = vsel %vm881, %v913, %v915
      %v917 = vsel %vm881, %v915, %v913
      %s918 = scalar_lea.vmem %s3, 32
      %v919 = vld [vmem:[%s918] sm:$0x3]
      %921 = vset.pattern.permute.xlu0 0
      %922 = vperm.xlu0 %921, %v919
      %v923 = vpop.permute.xlu0 %922
      %v925 = vmul.f32 %v923, %v917
      %v926 = vmul.f32 %v923, %v916
      %v927 = vadd.f32 %v910, %v925
      %v928 = vadd.f32 %v911, %v926
      %929 = vrot.lane.b32.xlu0 %v470, 16
      %v930 = vpop.permute.xlu0 %929
      %931 = vrot.lane.b32.xlu0 %v471, 16
      %v932 = vpop.permute.xlu0 %931
      %v933 = vsel %vm881, %v930, %v932
      %v934 = vsel %vm881, %v932, %v930
      %s935 = scalar_lea.vmem %s3, 34
      %v936 = vld [vmem:[%s935] sm:$0x3]
      %938 = vset.pattern.permute.xlu0 0
      %939 = vperm.xlu0 %938, %v936
      %v940 = vpop.permute.xlu0 %939
      %v942 = vmul.f32 %v940, %v934
      %v943 = vmul.f32 %v940, %v933
      %v944 = vadd.f32 %v927, %v942
      %v945 = vadd.f32 %v928, %v943
      %946 = vrot.lane.b32.xlu0 %v559, 16
      %v947 = vpop.permute.xlu0 %946
      %948 = vrot.lane.b32.xlu0 %v560, 16
      %v949 = vpop.permute.xlu0 %948
      %v950 = vsel %vm881, %v947, %v949
      %v951 = vsel %vm881, %v949, %v947
      %s952 = scalar_lea.vmem %s3, 36
      %v953 = vld [vmem:[%s952] sm:$0x3]
      %955 = vset.pattern.permute.xlu0 0
      %956 = vperm.xlu0 %955, %v953
      %v957 = vpop.permute.xlu0 %956
      %v959 = vmul.f32 %v957, %v951
      %v960 = vmul.f32 %v957, %v950
      %v961 = vadd.f32 %v944, %v959
      %v962 = vadd.f32 %v945, %v960
      %963 = vrot.lane.b32.xlu0 %v581, 16
      %v964 = vpop.permute.xlu0 %963
      %965 = vrot.lane.b32.xlu0 %v582, 16
      %v966 = vpop.permute.xlu0 %965
      %v967 = vsel %vm881, %v964, %v966
      %v968 = vsel %vm881, %v966, %v964
      %s969 = scalar_lea.vmem %s3, 38
      %v970 = vld [vmem:[%s969] sm:$0x3]
      %972 = vset.pattern.permute.xlu0 0
      %973 = vperm.xlu0 %972, %v970
      %v974 = vpop.permute.xlu0 %973
      %v976 = vmul.f32 %v974, %v968
      %v977 = vmul.f32 %v974, %v967
      %v978 = vadd.f32 %v961, %v976
      %v979 = vadd.f32 %v962, %v977
      %980 = vrot.lane.b32.xlu0 %v603, 16
      %v981 = vpop.permute.xlu0 %980
      %982 = vrot.lane.b32.xlu0 %v604, 16
      %v983 = vpop.permute.xlu0 %982
      %v984 = vsel %vm881, %v981, %v983
      %v985 = vsel %vm881, %v983, %v981
      %s986 = scalar_lea.vmem %s3, 40
      %v987 = vld [vmem:[%s986] sm:$0x3]
      %989 = vset.pattern.permute.xlu0 0
      %990 = vperm.xlu0 %989, %v987
      %v991 = vpop.permute.xlu0 %990
      %v993 = vmul.f32 %v991, %v985
      %v994 = vmul.f32 %v991, %v984
      %v995 = vadd.f32 %v978, %v993
      %v996 = vadd.f32 %v979, %v994
      %s997 = scalar_lea.vmem %s4, 2
      %v998 = vld [vmem:[%s997] ss:$8 sm:$0x3]
      %v1000 = vlaneseq
      %v1001 = vshrl.u32 %v1000, 7
      %v1002 = vsub.s32 0, %v1001
      %v1003 = vrot.slane %v998, %v1002
      %v1004 = vlaneseq
      %v1005 = vshrl.u32 %v1004, 7
      %v1006 = vsub.s32 1, %v1005
      %v1007 = vrot.slane %v998, %v1006
      %v1010 = vmul.f32 %v995, %v1003
      %v1011 = vmul.f32 %v996, %v1007
      %v1012 = vadd.f32 %v875, %v1010
      %v1013 = vadd.f32 %v876, %v1011
      %s1014 = scalar_lea.vmem %s3, 42
      %v1015 = vld [vmem:[%s1014] sm:$0x3]
      %1017 = vset.pattern.permute.xlu0 0
      %1018 = vperm.xlu0 %1017, %v1015
      %v1019 = vpop.permute.xlu0 %1018
      %v1021 = vmul.f32 %v1019, %v493
      %v1022 = vmul.f32 %v1019, %v494
      %v1023 = vadd.f32 %v1021, 0.0
      %v1024 = vadd.f32 %v1022, 0.0
      %s1025 = scalar_lea.vmem %s3, 44
      %v1026 = vld [vmem:[%s1025] sm:$0x3]
      %1028 = vset.pattern.permute.xlu0 0
      %1029 = vperm.xlu0 %1028, %v1026
      %v1030 = vpop.permute.xlu0 %1029
      %v1032 = vmul.f32 %v1030, %v515
      %v1033 = vmul.f32 %v1030, %v516
      %v1034 = vadd.f32 %v1023, %v1032
      %v1035 = vadd.f32 %v1024, %v1033
      %s1036 = scalar_lea.vmem %s3, 46
      %v1037 = vld [vmem:[%s1036] sm:$0x3]
      %1039 = vset.pattern.permute.xlu0 0
      %1040 = vperm.xlu0 %1039, %v1037
      %v1041 = vpop.permute.xlu0 %1040
      %v1043 = vmul.f32 %v1041, %v537
      %v1044 = vmul.f32 %v1041, %v538
      %v1045 = vadd.f32 %v1034, %v1043
      %v1046 = vadd.f32 %v1035, %v1044
      %s1047 = scalar_lea.vmem %s3, 48
      %v1048 = vld [vmem:[%s1047] sm:$0x3]
      %1050 = vset.pattern.permute.xlu0 0
      %1051 = vperm.xlu0 %1050, %v1048
      %v1052 = vpop.permute.xlu0 %1051
      %v1054 = vmul.f32 %v1052, %v470
      %v1055 = vmul.f32 %v1052, %v471
      %v1056 = vadd.f32 %v1045, %v1054
      %v1057 = vadd.f32 %v1046, %v1055
      %s1058 = scalar_lea.vmem %s3, 50
      %v1059 = vld [vmem:[%s1058] sm:$0x3]
      %1061 = vset.pattern.permute.xlu0 0
      %1062 = vperm.xlu0 %1061, %v1059
      %v1063 = vpop.permute.xlu0 %1062
      %v1065 = vmul.f32 %v1063, %v559
      %v1066 = vmul.f32 %v1063, %v560
      %v1067 = vadd.f32 %v1056, %v1065
      %v1068 = vadd.f32 %v1057, %v1066
      %s1069 = scalar_lea.vmem %s3, 52
      %v1070 = vld [vmem:[%s1069] sm:$0x3]
      %1072 = vset.pattern.permute.xlu0 0
      %1073 = vperm.xlu0 %1072, %v1070
      %v1074 = vpop.permute.xlu0 %1073
      %v1076 = vmul.f32 %v1074, %v581
      %v1077 = vmul.f32 %v1074, %v582
      %v1078 = vadd.f32 %v1067, %v1076
      %v1079 = vadd.f32 %v1068, %v1077
      %s1080 = scalar_lea.vmem %s3, 54
      %v1081 = vld [vmem:[%s1080] sm:$0x3]
      %1083 = vset.pattern.permute.xlu0 0
      %1084 = vperm.xlu0 %1083, %v1081
      %v1085 = vpop.permute.xlu0 %1084
      %v1087 = vmul.f32 %v1085, %v603
      %v1088 = vmul.f32 %v1085, %v604
      %v1089 = vadd.f32 %v1078, %v1087
      %v1090 = vadd.f32 %v1079, %v1088
      %v1091 = vadd.f32 %v1012, %v1089
      %v1092 = vadd.f32 %v1013, %v1090
      %1093 = vrot.lane.b32.xlu0 %v493, 112
      %v1094 = vpop.permute.xlu0 %1093
      %1095 = vrot.lane.b32.xlu0 %v494, 112
      %v1096 = vpop.permute.xlu0 %1095
      %vm1097 = vcmp.lt.s32.totalorder %v477, 112
      %v1098 = vsel %vm1097, %v1094, %v1096
      %v1099 = vsel %vm1097, %v1096, %v1094
      %s1100 = scalar_lea.vmem %s3, 56
      %v1101 = vld [vmem:[%s1100] sm:$0x3]
      %1103 = vset.pattern.permute.xlu0 0
      %1104 = vperm.xlu0 %1103, %v1101
      %v1105 = vpop.permute.xlu0 %1104
      %v1107 = vmul.f32 %v1105, %v1098
      %v1108 = vmul.f32 %v1105, %v1099
      %v1109 = vadd.f32 %v1107, 0.0
      %v1110 = vadd.f32 %v1108, 0.0
      %1111 = vrot.lane.b32.xlu0 %v515, 112
      %v1112 = vpop.permute.xlu0 %1111
      %1113 = vrot.lane.b32.xlu0 %v516, 112
      %v1114 = vpop.permute.xlu0 %1113
      %v1115 = vsel %vm1097, %v1112, %v1114
      %v1116 = vsel %vm1097, %v1114, %v1112
      %s1117 = scalar_lea.vmem %s3, 58
      %v1118 = vld [vmem:[%s1117] sm:$0x3]
      %1120 = vset.pattern.permute.xlu0 0
      %1121 = vperm.xlu0 %1120, %v1118
      %v1122 = vpop.permute.xlu0 %1121
      %v1124 = vmul.f32 %v1122, %v1115
      %v1125 = vmul.f32 %v1122, %v1116
      %v1126 = vadd.f32 %v1109, %v1124
      %v1127 = vadd.f32 %v1110, %v1125
      %1128 = vrot.lane.b32.xlu0 %v537, 112
      %v1129 = vpop.permute.xlu0 %1128
      %1130 = vrot.lane.b32.xlu0 %v538, 112
      %v1131 = vpop.permute.xlu0 %1130
      %v1132 = vsel %vm1097, %v1129, %v1131
      %v1133 = vsel %vm1097, %v1131, %v1129
      %s1134 = scalar_lea.vmem %s3, 60
      %v1135 = vld [vmem:[%s1134] sm:$0x3]
      %1137 = vset.pattern.permute.xlu0 0
      %1138 = vperm.xlu0 %1137, %v1135
      %v1139 = vpop.permute.xlu0 %1138
      %v1141 = vmul.f32 %v1139, %v1132
      %v1142 = vmul.f32 %v1139, %v1133
      %v1143 = vadd.f32 %v1126, %v1141
      %v1144 = vadd.f32 %v1127, %v1142
      %1145 = vrot.lane.b32.xlu0 %v470, 112
      %v1146 = vpop.permute.xlu0 %1145
      %1147 = vrot.lane.b32.xlu0 %v471, 112
      %v1148 = vpop.permute.xlu0 %1147
      %v1149 = vsel %vm1097, %v1146, %v1148
      %v1150 = vsel %vm1097, %v1148, %v1146
      %s1151 = scalar_lea.vmem %s3, 62
      %v1152 = vld [vmem:[%s1151] sm:$0x3]
      %1154 = vset.pattern.permute.xlu0 0
      %1155 = vperm.xlu0 %1154, %v1152
      %v1156 = vpop.permute.xlu0 %1155
      %v1158 = vmul.f32 %v1156, %v1149
      %v1159 = vmul.f32 %v1156, %v1150
      %v1160 = vadd.f32 %v1143, %v1158
      %v1161 = vadd.f32 %v1144, %v1159
      %1162 = vrot.lane.b32.xlu0 %v559, 112
      %v1163 = vpop.permute.xlu0 %1162
      %1164 = vrot.lane.b32.xlu0 %v560, 112
      %v1165 = vpop.permute.xlu0 %1164
      %v1166 = vsel %vm1097, %v1163, %v1165
      %v1167 = vsel %vm1097, %v1165, %v1163
      %s1168 = scalar_lea.vmem %s3, 64
      %v1169 = vld [vmem:[%s1168] sm:$0x3]
      %1171 = vset.pattern.permute.xlu0 0
      %1172 = vperm.xlu0 %1171, %v1169
      %v1173 = vpop.permute.xlu0 %1172
      %v1175 = vmul.f32 %v1173, %v1166
      %v1176 = vmul.f32 %v1173, %v1167
      %v1177 = vadd.f32 %v1160, %v1175
      %v1178 = vadd.f32 %v1161, %v1176
      %1179 = vrot.lane.b32.xlu0 %v581, 112
      %v1180 = vpop.permute.xlu0 %1179
      %1181 = vrot.lane.b32.xlu0 %v582, 112
      %v1182 = vpop.permute.xlu0 %1181
      %v1183 = vsel %vm1097, %v1180, %v1182
      %v1184 = vsel %vm1097, %v1182, %v1180
      %s1185 = scalar_lea.vmem %s3, 66
      %v1186 = vld [vmem:[%s1185] sm:$0x3]
      %1188 = vset.pattern.permute.xlu0 0
      %1189 = vperm.xlu0 %1188, %v1186
      %v1190 = vpop.permute.xlu0 %1189
      %v1192 = vmul.f32 %v1190, %v1183
      %v1193 = vmul.f32 %v1190, %v1184
      %v1194 = vadd.f32 %v1177, %v1192
      %v1195 = vadd.f32 %v1178, %v1193
      %1196 = vrot.lane.b32.xlu0 %v603, 112
      %v1197 = vpop.permute.xlu0 %1196
      %1198 = vrot.lane.b32.xlu0 %v604, 112
      %v1199 = vpop.permute.xlu0 %1198
      %v1200 = vsel %vm1097, %v1197, %v1199
      %v1201 = vsel %vm1097, %v1199, %v1197
      %s1202 = scalar_lea.vmem %s3, 68
      %v1203 = vld [vmem:[%s1202] sm:$0x3]
      %1205 = vset.pattern.permute.xlu0 0
      %1206 = vperm.xlu0 %1205, %v1203
      %v1207 = vpop.permute.xlu0 %1206
      %v1209 = vmul.f32 %v1207, %v1200
      %v1210 = vmul.f32 %v1207, %v1201
      %v1211 = vadd.f32 %v1194, %v1209
      %v1212 = vadd.f32 %v1195, %v1210
      %s1213 = scalar_lea.vmem %s4, 4
      %v1214 = vld [vmem:[%s1213] ss:$8 sm:$0x3]
      %v1216 = vlaneseq
      %v1217 = vshrl.u32 %v1216, 7
      %v1218 = vsub.s32 0, %v1217
      %v1219 = vrot.slane %v1214, %v1218
      %v1220 = vlaneseq
      %v1221 = vshrl.u32 %v1220, 7
      %v1222 = vsub.s32 1, %v1221
      %v1223 = vrot.slane %v1214, %v1222
      %v1226 = vmul.f32 %v1211, %v1219
      %v1227 = vmul.f32 %v1212, %v1223
      %v1228 = vadd.f32 %v1091, %v1226
      %v1229 = vadd.f32 %v1092, %v1227
      %1230 = vrot.lane.b32.xlu0 %v493, 96
      %v1231 = vpop.permute.xlu0 %1230
      %1232 = vrot.lane.b32.xlu0 %v494, 96
      %v1233 = vpop.permute.xlu0 %1232
      %vm1234 = vcmp.lt.s32.totalorder %v477, 96
      %v1235 = vsel %vm1234, %v1231, %v1233
      %v1236 = vsel %vm1234, %v1233, %v1231
      %s1237 = scalar_lea.vmem %s3, 70
      %v1238 = vld [vmem:[%s1237] sm:$0x3]
      %1240 = vset.pattern.permute.xlu0 0
      %1241 = vperm.xlu0 %1240, %v1238
      %v1242 = vpop.permute.xlu0 %1241
      %v1244 = vmul.f32 %v1242, %v1235
      %v1245 = vmul.f32 %v1242, %v1236
      %v1246 = vadd.f32 %v1244, 0.0
      %v1247 = vadd.f32 %v1245, 0.0
      %1248 = vrot.lane.b32.xlu0 %v515, 96
      %v1249 = vpop.permute.xlu0 %1248
      %1250 = vrot.lane.b32.xlu0 %v516, 96
      %v1251 = vpop.permute.xlu0 %1250
      %v1252 = vsel %vm1234, %v1249, %v1251
      %v1253 = vsel %vm1234, %v1251, %v1249
      %s1254 = scalar_lea.vmem %s3, 72
      %v1255 = vld [vmem:[%s1254] sm:$0x3]
      %1257 = vset.pattern.permute.xlu0 0
      %1258 = vperm.xlu0 %1257, %v1255
      %v1259 = vpop.permute.xlu0 %1258
      %v1261 = vmul.f32 %v1259, %v1252
      %v1262 = vmul.f32 %v1259, %v1253
      %v1263 = vadd.f32 %v1246, %v1261
      %v1264 = vadd.f32 %v1247, %v1262
      %1265 = vrot.lane.b32.xlu0 %v537, 96
      %v1266 = vpop.permute.xlu0 %1265
      %1267 = vrot.lane.b32.xlu0 %v538, 96
      %v1268 = vpop.permute.xlu0 %1267
      %v1269 = vsel %vm1234, %v1266, %v1268
      %v1270 = vsel %vm1234, %v1268, %v1266
      %s1271 = scalar_lea.vmem %s3, 74
      %v1272 = vld [vmem:[%s1271] sm:$0x3]
      %1274 = vset.pattern.permute.xlu0 0
      %1275 = vperm.xlu0 %1274, %v1272
      %v1276 = vpop.permute.xlu0 %1275
      %v1278 = vmul.f32 %v1276, %v1269
      %v1279 = vmul.f32 %v1276, %v1270
      %v1280 = vadd.f32 %v1263, %v1278
      %v1281 = vadd.f32 %v1264, %v1279
      %1282 = vrot.lane.b32.xlu0 %v470, 96
      %v1283 = vpop.permute.xlu0 %1282
      %1284 = vrot.lane.b32.xlu0 %v471, 96
      %v1285 = vpop.permute.xlu0 %1284
      %v1286 = vsel %vm1234, %v1283, %v1285
      %v1287 = vsel %vm1234, %v1285, %v1283
      %s1288 = scalar_lea.vmem %s3, 76
      %v1289 = vld [vmem:[%s1288] sm:$0x3]
      %1291 = vset.pattern.permute.xlu0 0
      %1292 = vperm.xlu0 %1291, %v1289
      %v1293 = vpop.permute.xlu0 %1292
      %v1295 = vmul.f32 %v1293, %v1286
      %v1296 = vmul.f32 %v1293, %v1287
      %v1297 = vadd.f32 %v1280, %v1295
      %v1298 = vadd.f32 %v1281, %v1296
      %1299 = vrot.lane.b32.xlu0 %v559, 96
      %v1300 = vpop.permute.xlu0 %1299
      %1301 = vrot.lane.b32.xlu0 %v560, 96
      %v1302 = vpop.permute.xlu0 %1301
      %v1303 = vsel %vm1234, %v1300, %v1302
      %v1304 = vsel %vm1234, %v1302, %v1300
      %s1305 = scalar_lea.vmem %s3, 78
      %v1306 = vld [vmem:[%s1305] sm:$0x3]
      %1308 = vset.pattern.permute.xlu0 0
      %1309 = vperm.xlu0 %1308, %v1306
      %v1310 = vpop.permute.xlu0 %1309
      %v1312 = vmul.f32 %v1310, %v1303
      %v1313 = vmul.f32 %v1310, %v1304
      %v1314 = vadd.f32 %v1297, %v1312
      %v1315 = vadd.f32 %v1298, %v1313
      %1316 = vrot.lane.b32.xlu0 %v581, 96
      %v1317 = vpop.permute.xlu0 %1316
      %1318 = vrot.lane.b32.xlu0 %v582, 96
      %v1319 = vpop.permute.xlu0 %1318
      %v1320 = vsel %vm1234, %v1317, %v1319
      %v1321 = vsel %vm1234, %v1319, %v1317
      %s1322 = scalar_lea.vmem %s3, 80
      %v1323 = vld [vmem:[%s1322] sm:$0x3]
      %1325 = vset.pattern.permute.xlu0 0
      %1326 = vperm.xlu0 %1325, %v1323
      %v1327 = vpop.permute.xlu0 %1326
      %v1329 = vmul.f32 %v1327, %v1320
      %v1330 = vmul.f32 %v1327, %v1321
      %v1331 = vadd.f32 %v1314, %v1329
      %v1332 = vadd.f32 %v1315, %v1330
      %1333 = vrot.lane.b32.xlu0 %v603, 96
      %v1334 = vpop.permute.xlu0 %1333
      %1335 = vrot.lane.b32.xlu0 %v604, 96
      %v1336 = vpop.permute.xlu0 %1335
      %v1337 = vsel %vm1234, %v1334, %v1336
      %v1338 = vsel %vm1234, %v1336, %v1334
      %s1339 = scalar_lea.vmem %s3, 82
      %v1340 = vld [vmem:[%s1339] sm:$0x3]
      %1342 = vset.pattern.permute.xlu0 0
      %1343 = vperm.xlu0 %1342, %v1340
      %v1344 = vpop.permute.xlu0 %1343
      %v1346 = vmul.f32 %v1344, %v1337
      %v1347 = vmul.f32 %v1344, %v1338
      %v1348 = vadd.f32 %v1331, %v1346
      %v1349 = vadd.f32 %v1332, %v1347
      %s1350 = scalar_lea.vmem %s4, 5
      %v1351 = vld [vmem:[%s1350] ss:$8 sm:$0x3]
      %v1353 = vlaneseq
      %v1354 = vshrl.u32 %v1353, 7
      %v1355 = vsub.s32 0, %v1354
      %v1356 = vrot.slane %v1351, %v1355
      %v1357 = vlaneseq
      %v1358 = vshrl.u32 %v1357, 7
      %v1359 = vsub.s32 1, %v1358
      %v1360 = vrot.slane %v1351, %v1359
      %v1363 = vmul.f32 %v1348, %v1356
      %v1364 = vmul.f32 %v1349, %v1360
      %v1365 = vadd.f32 %v1228, %v1363
      %v1366 = vadd.f32 %v1229, %v1364
      %1367 = vrot.lane.b32.xlu0 %v493, 80
      %v1368 = vpop.permute.xlu0 %1367
      %1369 = vrot.lane.b32.xlu0 %v494, 80
      %v1370 = vpop.permute.xlu0 %1369
      %vm1371 = vcmp.lt.s32.totalorder %v477, 80
      %v1372 = vsel %vm1371, %v1368, %v1370
      %v1373 = vsel %vm1371, %v1370, %v1368
      %s1374 = scalar_lea.vmem %s3, 84
      %v1375 = vld [vmem:[%s1374] sm:$0x3]
      %1377 = vset.pattern.permute.xlu0 0
      %1378 = vperm.xlu0 %1377, %v1375
      %v1379 = vpop.permute.xlu0 %1378
      %v1381 = vmul.f32 %v1379, %v1372
      %v1382 = vmul.f32 %v1379, %v1373
      %v1383 = vadd.f32 %v1381, 0.0
      %v1384 = vadd.f32 %v1382, 0.0
      %1385 = vrot.lane.b32.xlu0 %v515, 80
      %v1386 = vpop.permute.xlu0 %1385
      %1387 = vrot.lane.b32.xlu0 %v516, 80
      %v1388 = vpop.permute.xlu0 %1387
      %v1389 = vsel %vm1371, %v1386, %v1388
      %v1390 = vsel %vm1371, %v1388, %v1386
      %s1391 = scalar_lea.vmem %s3, 86
      %v1392 = vld [vmem:[%s1391] sm:$0x3]
      %1394 = vset.pattern.permute.xlu0 0
      %1395 = vperm.xlu0 %1394, %v1392
      %v1396 = vpop.permute.xlu0 %1395
      %v1398 = vmul.f32 %v1396, %v1389
      %v1399 = vmul.f32 %v1396, %v1390
      %v1400 = vadd.f32 %v1383, %v1398
      %v1401 = vadd.f32 %v1384, %v1399
      %1402 = vrot.lane.b32.xlu0 %v537, 80
      %v1403 = vpop.permute.xlu0 %1402
      %1404 = vrot.lane.b32.xlu0 %v538, 80
      %v1405 = vpop.permute.xlu0 %1404
      %v1406 = vsel %vm1371, %v1403, %v1405
      %v1407 = vsel %vm1371, %v1405, %v1403
      %s1408 = scalar_lea.vmem %s3, 88
      %v1409 = vld [vmem:[%s1408] sm:$0x3]
      %1411 = vset.pattern.permute.xlu0 0
      %1412 = vperm.xlu0 %1411, %v1409
      %v1413 = vpop.permute.xlu0 %1412
      %v1415 = vmul.f32 %v1413, %v1406
      %v1416 = vmul.f32 %v1413, %v1407
      %v1417 = vadd.f32 %v1400, %v1415
      %v1418 = vadd.f32 %v1401, %v1416
      %1419 = vrot.lane.b32.xlu0 %v470, 80
      %v1420 = vpop.permute.xlu0 %1419
      %1421 = vrot.lane.b32.xlu0 %v471, 80
      %v1422 = vpop.permute.xlu0 %1421
      %v1423 = vsel %vm1371, %v1420, %v1422
      %v1424 = vsel %vm1371, %v1422, %v1420
      %s1425 = scalar_lea.vmem %s3, 90
      %v1426 = vld [vmem:[%s1425] sm:$0x3]
      %1428 = vset.pattern.permute.xlu0 0
      %1429 = vperm.xlu0 %1428, %v1426
      %v1430 = vpop.permute.xlu0 %1429
      %v1432 = vmul.f32 %v1430, %v1423
      %v1433 = vmul.f32 %v1430, %v1424
      %v1434 = vadd.f32 %v1417, %v1432
      %v1435 = vadd.f32 %v1418, %v1433
      %1436 = vrot.lane.b32.xlu0 %v559, 80
      %v1437 = vpop.permute.xlu0 %1436
      %1438 = vrot.lane.b32.xlu0 %v560, 80
      %v1439 = vpop.permute.xlu0 %1438
      %v1440 = vsel %vm1371, %v1437, %v1439
      %v1441 = vsel %vm1371, %v1439, %v1437
      %s1442 = scalar_lea.vmem %s3, 92
      %v1443 = vld [vmem:[%s1442] sm:$0x3]
      %1445 = vset.pattern.permute.xlu0 0
      %1446 = vperm.xlu0 %1445, %v1443
      %v1447 = vpop.permute.xlu0 %1446
      %v1449 = vmul.f32 %v1447, %v1440
      %v1450 = vmul.f32 %v1447, %v1441
      %v1451 = vadd.f32 %v1434, %v1449
      %v1452 = vadd.f32 %v1435, %v1450
      %1453 = vrot.lane.b32.xlu0 %v581, 80
      %v1454 = vpop.permute.xlu0 %1453
      %1455 = vrot.lane.b32.xlu0 %v582, 80
      %v1456 = vpop.permute.xlu0 %1455
      %v1457 = vsel %vm1371, %v1454, %v1456
      %v1458 = vsel %vm1371, %v1456, %v1454
      %s1459 = scalar_lea.vmem %s3, 94
      %v1460 = vld [vmem:[%s1459] sm:$0x3]
      %1462 = vset.pattern.permute.xlu0 0
      %1463 = vperm.xlu0 %1462, %v1460
      %v1464 = vpop.permute.xlu0 %1463
      %v1466 = vmul.f32 %v1464, %v1457
      %v1467 = vmul.f32 %v1464, %v1458
      %v1468 = vadd.f32 %v1451, %v1466
      %v1469 = vadd.f32 %v1452, %v1467
      %1470 = vrot.lane.b32.xlu0 %v603, 80
      %v1471 = vpop.permute.xlu0 %1470
      %1472 = vrot.lane.b32.xlu0 %v604, 80
      %v1473 = vpop.permute.xlu0 %1472
      %v1474 = vsel %vm1371, %v1471, %v1473
      %v1475 = vsel %vm1371, %v1473, %v1471
      %s1476 = scalar_lea.vmem %s3, 96
      %v1477 = vld [vmem:[%s1476] sm:$0x3]
      %1479 = vset.pattern.permute.xlu0 0
      %1480 = vperm.xlu0 %1479, %v1477
      %v1481 = vpop.permute.xlu0 %1480
      %v1483 = vmul.f32 %v1481, %v1474
      %v1484 = vmul.f32 %v1481, %v1475
      %v1485 = vadd.f32 %v1468, %v1483
      %v1486 = vadd.f32 %v1469, %v1484
      %s1487 = scalar_lea.vmem %s4, 6
      %v1488 = vld [vmem:[%s1487] ss:$8 sm:$0x3]
      %v1490 = vlaneseq
      %v1491 = vshrl.u32 %v1490, 7
      %v1492 = vsub.s32 0, %v1491
      %v1493 = vrot.slane %v1488, %v1492
      %v1494 = vlaneseq
      %v1495 = vshrl.u32 %v1494, 7
      %v1496 = vsub.s32 1, %v1495
      %v1497 = vrot.slane %v1488, %v1496
      %v1500 = vmul.f32 %v1485, %v1493
      %v1501 = vmul.f32 %v1486, %v1497
      %v1502 = vadd.f32 %v1365, %v1500
      %v1503 = vadd.f32 %v1366, %v1501
      %v1506 = vrot.slane %v1502, 1
      %v1507 = vrot.slane %v1503, 1
      %v1510 = vadd.f32 %v1502, %v1506
      %v1511 = vadd.f32 %v1503, %v1507
      %s1512 = sld [smem:[#allocation2]]
      %v1513 = vstv %s1512
      %v1514 = vadd.f32 %v1510, %v1513
      %v1515 = vadd.f32 %v1511, %v1513
      %v1516 = vxor.u32 %v1514, 2147483648
      %v1517 = vxor.u32 %v1515, 2147483648
      %v1518 = vmul.f32 %v1516, 1.442695
      %v1519 = vpow.pop %v1518
      %v1520 = vmul.f32 %v1517, 1.442695
      %v1521 = vpow.pop %v1520
      %v1522 = vadd.f32 %v1519, 1.0
      %v1523 = vadd.f32 %v1521, 1.0
      %v1524 = vrcp.pop %v1522
      %v1525 = vmul.f32 1.0, %v1524
      %v1526 = vrcp.pop %v1523
      %v1527 = vmul.f32 1.0, %v1526
      %v1528 = vlaneseq
      %v1529 = vshrl.u32 %v1528, 7
      %v1530 = vsub.s32 0, %v1529
      %v1531 = vrot.slane %v1525, %v1530
      %v1532 = vlaneseq
      %v1533 = vshrl.u32 %v1532, 7
      %v1534 = vsub.s32 0, %v1533
      %v1535 = vrot.slane %v1527, %v1534
      %v1536 = vmul.f32 %v422, %v1531
      %v1537 = vmul.f32 %v423, %v1535
      %v1538 = vmul.f32 %v424, %v1531
      %v1539 = vmul.f32 %v425, %v1535
      %v1540 = vmul.f32 %v426, %v1531
      %v1541 = vmul.f32 %v427, %v1535
      %v1542 = vmul.f32 %v428, %v1531
      %v1543 = vmul.f32 %v429, %v1535
      %1544 = vst [vmem:[%s279] sm:$0xff] %v1536
      %1545 = vst [vmem:[%s279 + $0x8] sm:$0xff] %v1537
      %1546 = vst [vmem:[%s279 + $0x10] sm:$0xff] %v1538
      %1547 = vst [vmem:[%s279 + $0x18] sm:$0xff] %v1539
      %1548 = vst [vmem:[%s279 + $0x20] sm:$0xff] %v1540
      %1549 = vst [vmem:[%s279 + $0x28] sm:$0xff] %v1541
      %1550 = vst [vmem:[%s279 + $0x30] sm:$0xff] %v1542
      %1551 = vst [vmem:[%s279 + $0x38] sm:$0xff] %v1543
      %p1552 = scmp.lt.s32.totalorder %s19, 1
      %s1553 = scalar_select %p1552, %s19, 1
      %s1554 = smul.addr %s1553, 8
      %s1555 = smul.addr %s1554, 8
      %s1556 = scalar_lea.vmem %s7, %s1555
      // Predicated region
      $region49: #{cbam_pallas.1} parent=47 // pred_check
        %p1557 = pneg %p189
      $region50: #{cbam_pallas.1} parent=47 // pred_check_branch
        %1559 = sbr.rel (%p1557) target = $region52
      $region51: #{cbam_pallas.1} parent=47 // pred_region
        _
      $region52: #{cbam_pallas.1} parent=47 // pred_fallthru
        _
    $region48: #{cbam_pallas.1} parent=5 // pred_fallthru
      _
    %p1560 = scmp.le.s32.totalorder 2, %s14
    // Predicated region
    $region53: #{cbam_pallas.1} parent=5 // pred_check
      %p1561 = pneg %p1560
    $region54: #{cbam_pallas.1} parent=5 // pred_check_branch
      %1563 = sbr.rel (%p1561) target = $region56
    $region55: #{cbam_pallas.1} parent=5 // pred_region
      %s1564 = ssub.s32 %s14, 2
      // Predicated region
      $region57: #{cbam_pallas.1} parent=55 // pred_check
        %p1565 = pneg %p195
      $region58: #{cbam_pallas.1} parent=55 // pred_check_branch
        %1567 = sbr.rel (%p1565) target = $region60
      $region59: #{cbam_pallas.1} parent=55 // pred_region
        %p1568 = scmp.lt.s32.totalorder %s20, 1
        %s1569 = scalar_select %p1568, %s20, 1
        %s1570 = smul.addr %s1569, 8
        %s1571 = smul.addr %s1570, 8
        %s1572 = scalar_lea.vmem %s7, %s1571
      $region60: #{cbam_pallas.1} parent=55 // pred_fallthru
        _
    $region56: #{cbam_pallas.1} parent=5 // pred_fallthru
      _
  $region6: #{cbam_pallas.1} parent=0 // loop_footer
    %s18 = sadd.s32 1, %s14
  $region7: #{cbam_pallas.1} parent=0 // loop_footer_branch
    %13 = sbr.rel target = $region3
  $region8: #{cbam_pallas.1} parent=0 // loop_exit
    _

</llo_original>
